<compile_context>
chip_gen: v5e
topology: v5e:2x2
jax: 0.10.0
libtpu: 0.0.40
codegen_flags: <defaults>
</compile_context>

<pallas_src>
import math
from functools import partial

import jax
import jax.numpy as jnp
from jax.experimental import pallas as pl
from jax.experimental.pallas import tpu as pltpu

LEAKY_SLOPE = 0.01   # F.leaky_relu default


# --------------------------------- kernel ------------------------------------

def epic_generator_kernel(
    zg_ref, zl_ref, s_pool_ref, s_bcast_ref,
    w_loc0_ref, w_glob0_ref, w_glob1_ref,
    wg1m_ref, wg1s_ref, wg1g_ref, wg2_ref,
    wl1l_ref, wl1g_ref, wl2_ref, w_loc1_ref,
    biases_ref, out_ref,
    *, n_points, equiv_layers, hid_d, latent, feats,
):
    f32, bf16 = jnp.float32, jnp.bfloat16
    inv_n = f32(1.0 / n_points)

    def mm(a, b):                       # MXU: bf16 operands, f32 accumulation
        return jnp.dot(a, b, preferred_element_type=jnp.float32)

    def leaky(x):                       # 2 VALU ops (mul + max)
        return jnp.maximum(x, LEAKY_SLOPE * x)

    def bias(row, width):               # packed bias table, lane slice from 0
        return biases_ref[row:row + 1, :width]

    s_pool = s_pool_ref[...]            # (b_tile, bn) bf16, grid-invariant
    s_bcast = s_bcast_ref[...]          # (bn, b_tile) bf16, grid-invariant

    x_local = zl_ref[0]                 # (bn, latent_local)  bf16
    x_global = zg_ref[0]                # (b_tile, latent)    bf16

    # ---- stem: local_0, global_0, global_1 (elementwise stays f32) ----------
    z_local = leaky(mm(x_local, w_loc0_ref[...]) + bias(0, hid_d))        # (bn, hid)
    z_global = leaky(mm(x_global, w_glob0_ref[...]) + bias(1, hid_d))     # (bt, hid)
    z_global = leaky(mm(z_global.astype(bf16), w_glob1_ref[...])
                     + bias(2, latent))                                   # (bt, latent)

    z_global_in = z_global
    z_local_in = z_local

    # ---- EPiC equivariant layers (static unroll) -----------------------------
    for i in range(equiv_layers):
        r = 4 + 4 * i
        zl_b = z_local.astype(bf16)     # hoisted: reused by pooling + fc_local1
        zg_b = z_global.astype(bf16)

        # per-cloud pooling as a 0/1 segment matmul; mean derived from the sum
        pooled_sum = mm(s_pool, zl_b)                         # (b_tile, hid) f32
        pooled_mean = pooled_sum * inv_n

        # cat([mean, sum, global], 1) @ wg1  ==  split matmuls (pre-split weights)
        g1 = leaky(mm(pooled_mean.astype(bf16), wg1m_ref[i])
                   + mm(pooled_sum.astype(bf16), wg1s_ref[i])
                   + mm(zg_b, wg1g_ref[i])
                   + bias(r, hid_d))                          # (b_tile, hid)
        x_g = leaky(mm(g1.astype(bf16), wg2_ref[i])
                    + bias(r + 1, latent) + z_global)         # (b_tile, latent)

        # broadcast global -> per-point rows via 0/1 matmul (exact copy, f32 acc)
        xg_rep = mm(s_bcast, x_g.astype(bf16))                # (bn, latent) f32

        # cat([local, repeat(global)], 2) @ wl1  ==  split matmuls
        l1 = leaky(mm(zl_b, wl1l_ref[i])
                   + mm(xg_rep.astype(bf16), wl1g_ref[i])
                   + bias(r + 2, hid_d))                      # (bn, hid)
        x_l = leaky(mm(l1.astype(bf16), wl2_ref[i])
                    + bias(r + 3, hid_d) + z_local)           # (bn, hid)

        # generator-level residual connections
        z_global = x_g + z_global_in
        z_local = x_l + z_local_in

    # ---- head: local_1 (no activation), narrow (bn, feats) store ------------
    out_ref[0, :, :] = mm(z_local.astype(bf16), w_loc1_ref[...]) + bias(3, feats)


# --------------------------------- wrapper -----------------------------------

def _choose_b_tile(B, N):
    """Pick clouds-per-grid-step.

    Targets: bn = b_tile*N big enough to amortize the ~0.35us/step overhead
    (~512-1024 rows), b_tile <= 64 so the 0/1 selector matmuls stay cheap
    (their MXU cost is quadratic in b_tile), zero/low batch padding, >= 2 grid
    steps when the batch allows it (v7x dual-TensorCore sharding), and bn
    aligned to 256 (v6e/v7x MXU) when free.
    """
    align = 8 // math.gcd(N, 8)                       # keeps bn % 8 == 0
    cap = min(B, 64, max(align, -(-1024 // N)))
    cands = list(range(align, cap + 1, align))
    if not cands:
        return B                                       # tiny batch: one full tile
    two_step = [bt for bt in cands if -(-B // bt) >= 2]
    if two_step:
        cands = two_step

    def cost(bt):
        n_tiles = -(-B // bt)
        bn = bt * N
        work = n_tiles * (bn + 128)                    # rows processed + per-step overhead
        lane_pref = 0 if bn % 256 == 0 else (1 if bn % 128 == 0 else 2)
        return (work, lane_pref, -bn)

    return min(cands, key=cost)


def epic_generator(z_global, z_local, params, *, hid_d, equiv_layers):
    f32, bf16 = jnp.float32, jnp.bfloat16
    B, latent = z_global.shape
    _, N, latent_local = z_local.shape
    feats = params["w_loc1"].shape[1]
    L = equiv_layers

    b_tile = _choose_b_tile(B, N)
    n_tiles = -(-B // b_tile)
    b_pad = n_tiles * b_tile
    bn = b_tile * N

    if b_pad != B:                      # pad with zero clouds, sliced off below
        z_global = jnp.pad(z_global, ((0, b_pad - B), (0, 0)))
        z_local = jnp.pad(z_local, ((0, b_pad - B), (0, 0), (0, 0)))

    # bf16 inputs in [tile, rows, feature] layout: last two block dims are the
    # full array extent, so b_tile needs no (8,128) alignment.
    zg_t = z_global.astype(bf16).reshape(n_tiles, b_tile, latent)
    zl_t = z_local.astype(bf16).reshape(n_tiles, bn, latent_local)

    # grid-invariant 0/1 segment-selector matrices (values exact in bf16)
    p = jnp.arange(bn, dtype=jnp.int32) // N
    c = jnp.arange(b_tile, dtype=jnp.int32)
    s_pool = (p[None, :] == c[:, None]).astype(bf16)    # (b_tile, bn)
    s_bcast = (p[:, None] == c[None, :]).astype(bf16)   # (bn, b_tile)

    # packed bias table: rows 0-3 = stem/head, then 4 per equivariant layer
    W = max(hid_d, latent, feats)
    def brow(b):
        return jnp.pad(b.astype(f32), ((0, 0), (0, W - b.shape[1])))
    rows = [brow(params["b_loc0"]), brow(params["b_glob0"]),
            brow(params["b_glob1"]), brow(params["b_loc1"])]
    for i in range(L):
        rows += [brow(params["bg1"][i]), brow(params["bg2"][i]),
                 brow(params["bl1"][i]), brow(params["bl2"][i])]
    biases = jnp.concatenate(rows, axis=0)              # (4 + 4L, W) f32

    # weights: bf16 once; pre-split concatenated-input matrices
    wg1 = params["wg1"].astype(bf16)
    wl1 = params["wl1"].astype(bf16)
    weight_args = [
        params["w_loc0"].astype(bf16),
        params["w_glob0"].astype(bf16),
        params["w_glob1"].astype(bf16),
        wg1[:, :hid_d, :], wg1[:, hid_d:2 * hid_d, :], wg1[:, 2 * hid_d:, :],
        params["wg2"].astype(bf16),
        wl1[:, :hid_d, :], wl1[:, hid_d:, :],
        params["wl2"].astype(bf16),
        params["w_loc1"].astype(bf16),
        biases,
    ]

    def invariant(arr):                 # fetched once, constant block index
        nd = arr.ndim
        return pl.BlockSpec(arr.shape, lambda t, _nd=nd: (0,) * _nd)

    in_specs = [
        pl.BlockSpec((1, b_tile, latent), lambda t: (t, 0, 0)),
        pl.BlockSpec((1, bn, latent_local), lambda t: (t, 0, 0)),
        invariant(s_pool), invariant(s_bcast),
    ] + [invariant(a) for a in weight_args]

    kernel = partial(epic_generator_kernel, n_points=N, equiv_layers=L,
                     hid_d=hid_d, latent=latent, feats=feats)

    out = pl.pallas_call(
        kernel,
        out_shape=jax.ShapeDtypeStruct((n_tiles, bn, feats), f32),
        grid=(n_tiles,),
        in_specs=in_specs,
        out_specs=pl.BlockSpec((1, bn, feats), lambda t: (t, 0, 0)),
        compiler_params=pltpu.CompilerParams(
            dimension_semantics=("parallel",)),
    )(zg_t, zl_t, s_pool, s_bcast, *weight_args)

    return out.reshape(b_pad, N, feats)[:B]


# ----------------------- parameter construction ------------------------------

def init_linear(key, fan_in, fan_out):
    """PyTorch nn.Linear default init, stored as (in, out) + (1, out)."""
    kw, kb = jax.random.split(key)
    bound = 1.0 / jnp.sqrt(fan_in)
    w = jax.random.uniform(kw, (fan_in, fan_out), jnp.float32, -bound, bound)
    b = jax.random.uniform(kb, (1, fan_out), jnp.float32, -bound, bound)
    return w, b


def init_params(key, latent, latent_local, hid_d, feats, equiv_layers):
    keys = jax.random.split(key, 4 + equiv_layers)
    p = {}
    p["w_loc0"], p["b_loc0"] = init_linear(keys[0], latent_local, hid_d)
    p["w_glob0"], p["b_glob0"] = init_linear(keys[1], latent, hid_d)
    p["w_glob1"], p["b_glob1"] = init_linear(keys[2], hid_d, latent)
    p["w_loc1"], p["b_loc1"] = init_linear(keys[3], hid_d, feats)

    wg1, bg1, wg2, bg2, wl1, bl1, wl2, bl2 = [], [], [], [], [], [], [], []
    for i in range(equiv_layers):
        k = jax.random.split(keys[4 + i], 4)
        w, b = init_linear(k[0], 2 * hid_d + latent, hid_d); wg1.append(w); bg1.append(b)
        w, b = init_linear(k[1], hid_d, latent);             wg2.append(w); bg2.append(b)
        w, b = init_linear(k[2], hid_d + latent, hid_d);     wl1.append(w); bl1.append(b)
        w, b = init_linear(k[3], hid_d, hid_d);              wl2.append(w); bl2.append(b)
    p["wg1"] = jnp.stack(wg1); p["bg1"] = jnp.stack(bg1)
    p["wg2"] = jnp.stack(wg2); p["bg2"] = jnp.stack(bg2)
    p["wl1"] = jnp.stack(wl1); p["bl1"] = jnp.stack(bl1)
    p["wl2"] = jnp.stack(wl2); p["bl2"] = jnp.stack(bl2)
    return p


# ----------------------- pure-JAX references ---------------------------------

def reference(z_global, z_local, p, *, equiv_layers, bf16_dots=False):
    """bf16_dots=False: full-f32 HIGHEST reference (module semantics).
    bf16_dots=True : mirrors the kernel's numeric recipe (bf16 matmul operands,
    f32 accumulation, f32 elementwise)."""
    leaky = lambda x: jnp.where(x > 0, x, LEAKY_SLOPE * x)
    if bf16_dots:
        cast = lambda x: x.astype(jnp.bfloat16)
        lin = lambda x, w, b: jnp.dot(cast(x), cast(w),
                                      preferred_element_type=jnp.float32) + b
    else:
        hp = jax.lax.Precision.HIGHEST
        lin = lambda x, w, b: jnp.dot(x, w, precision=hp) + b

    z_local = leaky(lin(z_local, p["w_loc0"], p["b_loc0"]))
    z_global = leaky(lin(z_global, p["w_glob0"], p["b_glob0"]))
    z_global = leaky(lin(z_global, p["w_glob1"], p["b_glob1"]))
    z_global_in, z_local_in = z_global, z_local

    N = z_local.shape[1]
    inv_n = jnp.float32(1.0 / N)
    for i in range(equiv_layers):
        zl_pool = (z_local.astype(jnp.bfloat16).astype(jnp.float32)
                   if bf16_dots else z_local)
        ps = zl_pool.sum(1)
        pm = ps * inv_n
        cat = jnp.concatenate([pm, ps, z_global], axis=1)
        g1 = leaky(lin(cat, p["wg1"][i], p["bg1"][i]))
        x_g = leaky(lin(g1, p["wg2"][i], p["bg2"][i]) + z_global)
        g2l = jnp.repeat(x_g[:, None, :], N, axis=1)
        lc = jnp.concatenate([z_local, g2l], axis=2)
        l1 = leaky(lin(lc, p["wl1"][i], p["bl1"][i]))
        x_l = leaky(lin(l1, p["wl2"][i], p["bl2"][i]) + z_local)
        z_global = x_g + z_global_in
        z_local = x_l + z_local_in
    return lin(z_local, p["w_loc1"], p["b_loc1"])


if __name__ == "__main__":
    # args of EPiC_generator
    latent = 16          # args['latent']
    latent_local = 8     # args['latent_local']
    hid_d = 32           # args['hid_d']
    feats = 4            # args['feats']
    equiv_layers = 2     # args['equiv_layers_generator']
    B, N = 24, 8         # tile chooser picks b_tile=12 -> grid=2, no padding

    key = jax.random.PRNGKey(0)
    k_param, k_zg, k_zl = jax.random.split(key, 3)
    params = init_params(k_param, latent, latent_local, hid_d, feats, equiv_layers)

    z_global = jax.random.normal(k_zg, (B, latent), jnp.float32)
    z_local = jax.random.normal(k_zl, (B, N, latent_local), jnp.float32)

    out = epic_generator(z_global, z_local, params,
                         hid_d=hid_d, equiv_layers=equiv_layers)
    out = jax.block_until_ready(out)

    assert out.shape == (B, N, feats), out.shape
    assert bool(jnp.all(jnp.isfinite(out)))

    # (1) matched-precision reference (bf16 matmul operands, f32 accumulation):
    #     validates the kernel implementation itself.
    ref_bf16 = reference(z_global, z_local, params,
                         equiv_layers=equiv_layers, bf16_dots=True)
    assert jnp.allclose(out, ref_bf16, atol=1e-2, rtol=1e-2), \
        f"max abs diff vs matched ref {jnp.max(jnp.abs(out - ref_bf16))}"

    # (2) full-f32 reference: documents the expected bf16-MXU numerical gap.
    ref_f32 = reference(z_global, z_local, params,
                        equiv_layers=equiv_layers, bf16_dots=False)
    assert jnp.allclose(out, ref_f32, atol=5e-2, rtol=5e-2), \
        f"max abs diff vs f32 ref {jnp.max(jnp.abs(out - ref_f32))}"

    print("KERNEL_OK")
</pallas_src>

<mosaic_0001>
module attributes {stable_mosaic.version = 11 : i64} {
  func.func @epic_generator_kernel(%arg0: i32, %arg1: memref<1x12x16xbf16, #tpu.memory_space<vmem>>, %arg2: memref<1x96x8xbf16, #tpu.memory_space<vmem>>, %arg3: memref<12x96xbf16, #tpu.memory_space<vmem>>, %arg4: memref<96x12xbf16, #tpu.memory_space<vmem>>, %arg5: memref<8x32xbf16, #tpu.memory_space<vmem>>, %arg6: memref<16x32xbf16, #tpu.memory_space<vmem>>, %arg7: memref<32x16xbf16, #tpu.memory_space<vmem>>, %arg8: memref<2x32x32xbf16, #tpu.memory_space<vmem>>, %arg9: memref<2x32x32xbf16, #tpu.memory_space<vmem>>, %arg10: memref<2x16x32xbf16, #tpu.memory_space<vmem>>, %arg11: memref<2x32x16xbf16, #tpu.memory_space<vmem>>, %arg12: memref<2x32x32xbf16, #tpu.memory_space<vmem>>, %arg13: memref<2x16x32xbf16, #tpu.memory_space<vmem>>, %arg14: memref<2x32x32xbf16, #tpu.memory_space<vmem>>, %arg15: memref<32x4xbf16, #tpu.memory_space<vmem>>, %arg16: memref<12x32xf32, #tpu.memory_space<vmem>>, %arg17: memref<1x96x4xf32, #tpu.memory_space<vmem>>) attributes {dimension_semantics = [#tpu.dimension_semantics<parallel>], iteration_bounds = array<i64: 2>, scalar_prefetch = 0 : i64, scratch_operands = 0 : i64, tpu.core_type = #tpu.core_type<tc>, window_params = [{transform_indices = @transform_0, window_bounds = array<i64: 1, 12, 16>}, {transform_indices = @transform_1, window_bounds = array<i64: 1, 96, 8>}, {pipeline_mode = #tpu.pipeline_mode<synchronous>, transform_indices = @transform_2, window_bounds = array<i64: 12, 96>}, {pipeline_mode = #tpu.pipeline_mode<synchronous>, transform_indices = @transform_3, window_bounds = array<i64: 96, 12>}, {pipeline_mode = #tpu.pipeline_mode<synchronous>, transform_indices = @transform_4, window_bounds = array<i64: 8, 32>}, {pipeline_mode = #tpu.pipeline_mode<synchronous>, transform_indices = @transform_5, window_bounds = array<i64: 16, 32>}, {pipeline_mode = #tpu.pipeline_mode<synchronous>, transform_indices = @transform_6, window_bounds = array<i64: 32, 16>}, {pipeline_mode = #tpu.pipeline_mode<synchronous>, transform_indices = @transform_7, window_bounds = array<i64: 2, 32, 32>}, {pipeline_mode = #tpu.pipeline_mode<synchronous>, transform_indices = @transform_8, window_bounds = array<i64: 2, 32, 32>}, {pipeline_mode = #tpu.pipeline_mode<synchronous>, transform_indices = @transform_9, window_bounds = array<i64: 2, 16, 32>}, {pipeline_mode = #tpu.pipeline_mode<synchronous>, transform_indices = @transform_10, window_bounds = array<i64: 2, 32, 16>}, {pipeline_mode = #tpu.pipeline_mode<synchronous>, transform_indices = @transform_11, window_bounds = array<i64: 2, 32, 32>}, {pipeline_mode = #tpu.pipeline_mode<synchronous>, transform_indices = @transform_12, window_bounds = array<i64: 2, 16, 32>}, {pipeline_mode = #tpu.pipeline_mode<synchronous>, transform_indices = @transform_13, window_bounds = array<i64: 2, 32, 32>}, {pipeline_mode = #tpu.pipeline_mode<synchronous>, transform_indices = @transform_14, window_bounds = array<i64: 32, 4>}, {pipeline_mode = #tpu.pipeline_mode<synchronous>, transform_indices = @transform_15, window_bounds = array<i64: 12, 32>}, {transform_indices = @transform_16, window_bounds = array<i64: 1, 96, 4>}]} {
    %c0 = arith.constant 0 : index
    %c0_0 = arith.constant 0 : index
    %0 = vector.load %arg3[%c0, %c0_0] : memref<12x96xbf16, #tpu.memory_space<vmem>>, vector<12x96xbf16>
    %c0_1 = arith.constant 0 : index
    %c0_2 = arith.constant 0 : index
    %1 = vector.load %arg4[%c0_1, %c0_2] : memref<96x12xbf16, #tpu.memory_space<vmem>>, vector<96x12xbf16>
    %c0_3 = arith.constant 0 : index
    %c0_4 = arith.constant 0 : index
    %c0_5 = arith.constant 0 : index
    %2 = vector.load %arg2[%c0_3, %c0_4, %c0_5] : memref<1x96x8xbf16, #tpu.memory_space<vmem>>, vector<1x96x8xbf16>
    %3 = vector.shape_cast %2 : vector<1x96x8xbf16> to vector<96x8xbf16>
    %c0_6 = arith.constant 0 : index
    %c0_7 = arith.constant 0 : index
    %c0_8 = arith.constant 0 : index
    %4 = vector.load %arg1[%c0_6, %c0_7, %c0_8] : memref<1x12x16xbf16, #tpu.memory_space<vmem>>, vector<1x12x16xbf16>
    %5 = vector.shape_cast %4 : vector<1x12x16xbf16> to vector<12x16xbf16>
    %c0_9 = arith.constant 0 : index
    %c0_10 = arith.constant 0 : index
    %6 = vector.load %arg5[%c0_9, %c0_10] : memref<8x32xbf16, #tpu.memory_space<vmem>>, vector<8x32xbf16>
    %cst = arith.constant dense<0.000000e+00> : vector<96x32xf32>
    %7 = tpu.matmul %3, %6, %cst {dimension_numbers = #tpu.dot_dimension_numbers<[1], [0], [0], [1], [0, 0, 1, 1], [], []>} : vector<96x8xbf16>, vector<8x32xbf16>, vector<96x32xf32> -> vector<96x32xf32>
    %c0_11 = arith.constant 0 : index
    %c0_12 = arith.constant 0 : index
    %8 = vector.load %arg16[%c0_11, %c0_12] : memref<12x32xf32, #tpu.memory_space<vmem>>, vector<1x32xf32>
    %9 = vector.broadcast %8 : vector<1x32xf32> to vector<96x32xf32>
    %10 = arith.addf %7, %9 : vector<96x32xf32>
    %cst_13 = arith.constant 0.00999999977 : f32
    %11 = vector.broadcast %cst_13 : f32 to vector<96x32xf32>
    %12 = arith.mulf %11, %10 : vector<96x32xf32>
    %13 = arith.maximumf %10, %12 : vector<96x32xf32>
    %c0_14 = arith.constant 0 : index
    %c0_15 = arith.constant 0 : index
    %14 = vector.load %arg6[%c0_14, %c0_15] : memref<16x32xbf16, #tpu.memory_space<vmem>>, vector<16x32xbf16>
    %cst_16 = arith.constant dense<0.000000e+00> : vector<12x32xf32>
    %15 = tpu.matmul %5, %14, %cst_16 {dimension_numbers = #tpu.dot_dimension_numbers<[1], [0], [0], [1], [0, 0, 1, 1], [], []>} : vector<12x16xbf16>, vector<16x32xbf16>, vector<12x32xf32> -> vector<12x32xf32>
    %c1 = arith.constant 1 : index
    %c0_17 = arith.constant 0 : index
    %16 = vector.load %arg16[%c1, %c0_17] : memref<12x32xf32, #tpu.memory_space<vmem>>, vector<1x32xf32>
    %17 = vector.broadcast %16 : vector<1x32xf32> to vector<12x32xf32>
    %18 = arith.addf %15, %17 : vector<12x32xf32>
    %cst_18 = arith.constant 0.00999999977 : f32
    %19 = vector.broadcast %cst_18 : f32 to vector<12x32xf32>
    %20 = arith.mulf %19, %18 : vector<12x32xf32>
    %21 = arith.maximumf %18, %20 : vector<12x32xf32>
    %22 = arith.truncf %21 : vector<12x32xf32> to vector<12x32xbf16>
    %c0_19 = arith.constant 0 : index
    %c0_20 = arith.constant 0 : index
    %23 = vector.load %arg7[%c0_19, %c0_20] : memref<32x16xbf16, #tpu.memory_space<vmem>>, vector<32x16xbf16>
    %cst_21 = arith.constant dense<0.000000e+00> : vector<12x16xf32>
    %24 = tpu.matmul %22, %23, %cst_21 {dimension_numbers = #tpu.dot_dimension_numbers<[1], [0], [0], [1], [0, 0, 1, 1], [], []>} : vector<12x32xbf16>, vector<32x16xbf16>, vector<12x16xf32> -> vector<12x16xf32>
    %c2 = arith.constant 2 : index
    %c0_22 = arith.constant 0 : index
    %25 = vector.load %arg16[%c2, %c0_22] : memref<12x32xf32, #tpu.memory_space<vmem>>, vector<1x16xf32>
    %26 = vector.broadcast %25 : vector<1x16xf32> to vector<12x16xf32>
    %27 = arith.addf %24, %26 : vector<12x16xf32>
    %cst_23 = arith.constant 0.00999999977 : f32
    %28 = vector.broadcast %cst_23 : f32 to vector<12x16xf32>
    %29 = arith.mulf %28, %27 : vector<12x16xf32>
    %30 = arith.maximumf %27, %29 : vector<12x16xf32>
    %31 = arith.truncf %13 : vector<96x32xf32> to vector<96x32xbf16>
    %32 = arith.truncf %30 : vector<12x16xf32> to vector<12x16xbf16>
    %cst_24 = arith.constant dense<0.000000e+00> : vector<12x32xf32>
    %33 = tpu.matmul %0, %31, %cst_24 {dimension_numbers = #tpu.dot_dimension_numbers<[1], [0], [0], [1], [0, 0, 1, 1], [], []>} : vector<12x96xbf16>, vector<96x32xbf16>, vector<12x32xf32> -> vector<12x32xf32>
    %cst_25 = arith.constant 1.250000e-01 : f32
    %34 = vector.broadcast %cst_25 : f32 to vector<12x32xf32>
    %35 = arith.mulf %33, %34 : vector<12x32xf32>
    %36 = arith.truncf %35 : vector<12x32xf32> to vector<12x32xbf16>
    %c0_26 = arith.constant 0 : index
    %c0_27 = arith.constant 0 : index
    %c0_28 = arith.constant 0 : index
    %37 = vector.load %arg8[%c0_26, %c0_27, %c0_28] : memref<2x32x32xbf16, #tpu.memory_space<vmem>>, vector<1x32x32xbf16>
    %38 = vector.shape_cast %37 : vector<1x32x32xbf16> to vector<32x32xbf16>
    %cst_29 = arith.constant dense<0.000000e+00> : vector<12x32xf32>
    %39 = tpu.matmul %36, %38, %cst_29 {dimension_numbers = #tpu.dot_dimension_numbers<[1], [0], [0], [1], [0, 0, 1, 1], [], []>} : vector<12x32xbf16>, vector<32x32xbf16>, vector<12x32xf32> -> vector<12x32xf32>
    %40 = arith.truncf %33 : vector<12x32xf32> to vector<12x32xbf16>
    %c0_30 = arith.constant 0 : index
    %c0_31 = arith.constant 0 : index
    %c0_32 = arith.constant 0 : index
    %41 = vector.load %arg9[%c0_30, %c0_31, %c0_32] : memref<2x32x32xbf16, #tpu.memory_space<vmem>>, vector<1x32x32xbf16>
    %42 = vector.shape_cast %41 : vector<1x32x32xbf16> to vector<32x32xbf16>
    %cst_33 = arith.constant dense<0.000000e+00> : vector<12x32xf32>
    %43 = tpu.matmul %40, %42, %cst_33 {dimension_numbers = #tpu.dot_dimension_numbers<[1], [0], [0], [1], [0, 0, 1, 1], [], []>} : vector<12x32xbf16>, vector<32x32xbf16>, vector<12x32xf32> -> vector<12x32xf32>
    %44 = arith.addf %39, %43 : vector<12x32xf32>
    %c0_34 = arith.constant 0 : index
    %c0_35 = arith.constant 0 : index
    %c0_36 = arith.constant 0 : index
    %45 = vector.load %arg10[%c0_34, %c0_35, %c0_36] : memref<2x16x32xbf16, #tpu.memory_space<vmem>>, vector<1x16x32xbf16>
    %46 = vector.shape_cast %45 : vector<1x16x32xbf16> to vector<16x32xbf16>
    %cst_37 = arith.constant dense<0.000000e+00> : vector<12x32xf32>
    %47 = tpu.matmul %32, %46, %cst_37 {dimension_numbers = #tpu.dot_dimension_numbers<[1], [0], [0], [1], [0, 0, 1, 1], [], []>} : vector<12x16xbf16>, vector<16x32xbf16>, vector<12x32xf32> -> vector<12x32xf32>
    %48 = arith.addf %44, %47 : vector<12x32xf32>
    %c4 = arith.constant 4 : index
    %c0_38 = arith.constant 0 : index
    %49 = vector.load %arg16[%c4, %c0_38] : memref<12x32xf32, #tpu.memory_space<vmem>>, vector<1x32xf32>
    %50 = vector.broadcast %49 : vector<1x32xf32> to vector<12x32xf32>
    %51 = arith.addf %48, %50 : vector<12x32xf32>
    %cst_39 = arith.constant 0.00999999977 : f32
    %52 = vector.broadcast %cst_39 : f32 to vector<12x32xf32>
    %53 = arith.mulf %52, %51 : vector<12x32xf32>
    %54 = arith.maximumf %51, %53 : vector<12x32xf32>
    %55 = arith.truncf %54 : vector<12x32xf32> to vector<12x32xbf16>
    %c0_40 = arith.constant 0 : index
    %c0_41 = arith.constant 0 : index
    %c0_42 = arith.constant 0 : index
    %56 = vector.load %arg11[%c0_40, %c0_41, %c0_42] : memref<2x32x16xbf16, #tpu.memory_space<vmem>>, vector<1x32x16xbf16>
    %57 = vector.shape_cast %56 : vector<1x32x16xbf16> to vector<32x16xbf16>
    %cst_43 = arith.constant dense<0.000000e+00> : vector<12x16xf32>
    %58 = tpu.matmul %55, %57, %cst_43 {dimension_numbers = #tpu.dot_dimension_numbers<[1], [0], [0], [1], [0, 0, 1, 1], [], []>} : vector<12x32xbf16>, vector<32x16xbf16>, vector<12x16xf32> -> vector<12x16xf32>
    %c5 = arith.constant 5 : index
    %c0_44 = arith.constant 0 : index
    %59 = vector.load %arg16[%c5, %c0_44] : memref<12x32xf32, #tpu.memory_space<vmem>>, vector<1x16xf32>
    %60 = vector.broadcast %59 : vector<1x16xf32> to vector<12x16xf32>
    %61 = arith.addf %58, %60 : vector<12x16xf32>
    %62 = arith.addf %61, %30 : vector<12x16xf32>
    %cst_45 = arith.constant 0.00999999977 : f32
    %63 = vector.broadcast %cst_45 : f32 to vector<12x16xf32>
    %64 = arith.mulf %63, %62 : vector<12x16xf32>
    %65 = arith.maximumf %62, %64 : vector<12x16xf32>
    %66 = arith.truncf %65 : vector<12x16xf32> to vector<12x16xbf16>
    %cst_46 = arith.constant dense<0.000000e+00> : vector<96x16xf32>
    %67 = tpu.matmul %1, %66, %cst_46 {dimension_numbers = #tpu.dot_dimension_numbers<[1], [0], [0], [1], [0, 0, 1, 1], [], []>} : vector<96x12xbf16>, vector<12x16xbf16>, vector<96x16xf32> -> vector<96x16xf32>
    %c0_47 = arith.constant 0 : index
    %c0_48 = arith.constant 0 : index
    %c0_49 = arith.constant 0 : index
    %68 = vector.load %arg12[%c0_47, %c0_48, %c0_49] : memref<2x32x32xbf16, #tpu.memory_space<vmem>>, vector<1x32x32xbf16>
    %69 = vector.shape_cast %68 : vector<1x32x32xbf16> to vector<32x32xbf16>
    %cst_50 = arith.constant dense<0.000000e+00> : vector<96x32xf32>
    %70 = tpu.matmul %31, %69, %cst_50 {dimension_numbers = #tpu.dot_dimension_numbers<[1], [0], [0], [1], [0, 0, 1, 1], [], []>} : vector<96x32xbf16>, vector<32x32xbf16>, vector<96x32xf32> -> vector<96x32xf32>
    %71 = arith.truncf %67 : vector<96x16xf32> to vector<96x16xbf16>
    %c0_51 = arith.constant 0 : index
    %c0_52 = arith.constant 0 : index
    %c0_53 = arith.constant 0 : index
    %72 = vector.load %arg13[%c0_51, %c0_52, %c0_53] : memref<2x16x32xbf16, #tpu.memory_space<vmem>>, vector<1x16x32xbf16>
    %73 = vector.shape_cast %72 : vector<1x16x32xbf16> to vector<16x32xbf16>
    %cst_54 = arith.constant dense<0.000000e+00> : vector<96x32xf32>
    %74 = tpu.matmul %71, %73, %cst_54 {dimension_numbers = #tpu.dot_dimension_numbers<[1], [0], [0], [1], [0, 0, 1, 1], [], []>} : vector<96x16xbf16>, vector<16x32xbf16>, vector<96x32xf32> -> vector<96x32xf32>
    %75 = arith.addf %70, %74 : vector<96x32xf32>
    %c6 = arith.constant 6 : index
    %c0_55 = arith.constant 0 : index
    %76 = vector.load %arg16[%c6, %c0_55] : memref<12x32xf32, #tpu.memory_space<vmem>>, vector<1x32xf32>
    %77 = vector.broadcast %76 : vector<1x32xf32> to vector<96x32xf32>
    %78 = arith.addf %75, %77 : vector<96x32xf32>
    %cst_56 = arith.constant 0.00999999977 : f32
    %79 = vector.broadcast %cst_56 : f32 to vector<96x32xf32>
    %80 = arith.mulf %79, %78 : vector<96x32xf32>
    %81 = arith.maximumf %78, %80 : vector<96x32xf32>
    %82 = arith.truncf %81 : vector<96x32xf32> to vector<96x32xbf16>
    %c0_57 = arith.constant 0 : index
    %c0_58 = arith.constant 0 : index
    %c0_59 = arith.constant 0 : index
    %83 = vector.load %arg14[%c0_57, %c0_58, %c0_59] : memref<2x32x32xbf16, #tpu.memory_space<vmem>>, vector<1x32x32xbf16>
    %84 = vector.shape_cast %83 : vector<1x32x32xbf16> to vector<32x32xbf16>
    %cst_60 = arith.constant dense<0.000000e+00> : vector<96x32xf32>
    %85 = tpu.matmul %82, %84, %cst_60 {dimension_numbers = #tpu.dot_dimension_numbers<[1], [0], [0], [1], [0, 0, 1, 1], [], []>} : vector<96x32xbf16>, vector<32x32xbf16>, vector<96x32xf32> -> vector<96x32xf32>
    %c7 = arith.constant 7 : index
    %c0_61 = arith.constant 0 : index
    %86 = vector.load %arg16[%c7, %c0_61] : memref<12x32xf32, #tpu.memory_space<vmem>>, vector<1x32xf32>
    %87 = vector.broadcast %86 : vector<1x32xf32> to vector<96x32xf32>
    %88 = arith.addf %85, %87 : vector<96x32xf32>
    %89 = arith.addf %88, %13 : vector<96x32xf32>
    %cst_62 = arith.constant 0.00999999977 : f32
    %90 = vector.broadcast %cst_62 : f32 to vector<96x32xf32>
    %91 = arith.mulf %90, %89 : vector<96x32xf32>
    %92 = arith.maximumf %89, %91 : vector<96x32xf32>
    %93 = arith.addf %65, %30 : vector<12x16xf32>
    %94 = arith.addf %92, %13 : vector<96x32xf32>
    %95 = arith.truncf %94 : vector<96x32xf32> to vector<96x32xbf16>
    %96 = arith.truncf %93 : vector<12x16xf32> to vector<12x16xbf16>
    %cst_63 = arith.constant dense<0.000000e+00> : vector<12x32xf32>
    %97 = tpu.matmul %0, %95, %cst_63 {dimension_numbers = #tpu.dot_dimension_numbers<[1], [0], [0], [1], [0, 0, 1, 1], [], []>} : vector<12x96xbf16>, vector<96x32xbf16>, vector<12x32xf32> -> vector<12x32xf32>
    %cst_64 = arith.constant 1.250000e-01 : f32
    %98 = vector.broadcast %cst_64 : f32 to vector<12x32xf32>
    %99 = arith.mulf %97, %98 : vector<12x32xf32>
    %100 = arith.truncf %99 : vector<12x32xf32> to vector<12x32xbf16>
    %c1_65 = arith.constant 1 : index
    %c0_66 = arith.constant 0 : index
    %c0_67 = arith.constant 0 : index
    %101 = vector.load %arg8[%c1_65, %c0_66, %c0_67] : memref<2x32x32xbf16, #tpu.memory_space<vmem>>, vector<1x32x32xbf16>
    %102 = vector.shape_cast %101 : vector<1x32x32xbf16> to vector<32x32xbf16>
    %cst_68 = arith.constant dense<0.000000e+00> : vector<12x32xf32>
    %103 = tpu.matmul %100, %102, %cst_68 {dimension_numbers = #tpu.dot_dimension_numbers<[1], [0], [0], [1], [0, 0, 1, 1], [], []>} : vector<12x32xbf16>, vector<32x32xbf16>, vector<12x32xf32> -> vector<12x32xf32>
    %104 = arith.truncf %97 : vector<12x32xf32> to vector<12x32xbf16>
    %c1_69 = arith.constant 1 : index
    %c0_70 = arith.constant 0 : index
    %c0_71 = arith.constant 0 : index
    %105 = vector.load %arg9[%c1_69, %c0_70, %c0_71] : memref<2x32x32xbf16, #tpu.memory_space<vmem>>, vector<1x32x32xbf16>
    %106 = vector.shape_cast %105 : vector<1x32x32xbf16> to vector<32x32xbf16>
    %cst_72 = arith.constant dense<0.000000e+00> : vector<12x32xf32>
    %107 = tpu.matmul %104, %106, %cst_72 {dimension_numbers = #tpu.dot_dimension_numbers<[1], [0], [0], [1], [0, 0, 1, 1], [], []>} : vector<12x32xbf16>, vector<32x32xbf16>, vector<12x32xf32> -> vector<12x32xf32>
    %108 = arith.addf %103, %107 : vector<12x32xf32>
    %c1_73 = arith.constant 1 : index
    %c0_74 = arith.constant 0 : index
    %c0_75 = arith.constant 0 : index
    %109 = vector.load %arg10[%c1_73, %c0_74, %c0_75] : memref<2x16x32xbf16, #tpu.memory_space<vmem>>, vector<1x16x32xbf16>
    %110 = vector.shape_cast %109 : vector<1x16x32xbf16> to vector<16x32xbf16>
    %cst_76 = arith.constant dense<0.000000e+00> : vector<12x32xf32>
    %111 = tpu.matmul %96, %110, %cst_76 {dimension_numbers = #tpu.dot_dimension_numbers<[1], [0], [0], [1], [0, 0, 1, 1], [], []>} : vector<12x16xbf16>, vector<16x32xbf16>, vector<12x32xf32> -> vector<12x32xf32>
    %112 = arith.addf %108, %111 : vector<12x32xf32>
    %c8 = arith.constant 8 : index
    %c0_77 = arith.constant 0 : index
    %113 = vector.load %arg16[%c8, %c0_77] : memref<12x32xf32, #tpu.memory_space<vmem>>, vector<1x32xf32>
    %114 = vector.broadcast %113 : vector<1x32xf32> to vector<12x32xf32>
    %115 = arith.addf %112, %114 : vector<12x32xf32>
    %cst_78 = arith.constant 0.00999999977 : f32
    %116 = vector.broadcast %cst_78 : f32 to vector<12x32xf32>
    %117 = arith.mulf %116, %115 : vector<12x32xf32>
    %118 = arith.maximumf %115, %117 : vector<12x32xf32>
    %119 = arith.truncf %118 : vector<12x32xf32> to vector<12x32xbf16>
    %c1_79 = arith.constant 1 : index
    %c0_80 = arith.constant 0 : index
    %c0_81 = arith.constant 0 : index
    %120 = vector.load %arg11[%c1_79, %c0_80, %c0_81] : memref<2x32x16xbf16, #tpu.memory_space<vmem>>, vector<1x32x16xbf16>
    %121 = vector.shape_cast %120 : vector<1x32x16xbf16> to vector<32x16xbf16>
    %cst_82 = arith.constant dense<0.000000e+00> : vector<12x16xf32>
    %122 = tpu.matmul %119, %121, %cst_82 {dimension_numbers = #tpu.dot_dimension_numbers<[1], [0], [0], [1], [0, 0, 1, 1], [], []>} : vector<12x32xbf16>, vector<32x16xbf16>, vector<12x16xf32> -> vector<12x16xf32>
    %c9 = arith.constant 9 : index
    %c0_83 = arith.constant 0 : index
    %123 = vector.load %arg16[%c9, %c0_83] : memref<12x32xf32, #tpu.memory_space<vmem>>, vector<1x16xf32>
    %124 = vector.broadcast %123 : vector<1x16xf32> to vector<12x16xf32>
    %125 = arith.addf %122, %124 : vector<12x16xf32>
    %126 = arith.addf %125, %93 : vector<12x16xf32>
    %cst_84 = arith.constant 0.00999999977 : f32
    %127 = vector.broadcast %cst_84 : f32 to vector<12x16xf32>
    %128 = arith.mulf %127, %126 : vector<12x16xf32>
    %129 = arith.maximumf %126, %128 : vector<12x16xf32>
    %130 = arith.truncf %129 : vector<12x16xf32> to vector<12x16xbf16>
    %cst_85 = arith.constant dense<0.000000e+00> : vector<96x16xf32>
    %131 = tpu.matmul %1, %130, %cst_85 {dimension_numbers = #tpu.dot_dimension_numbers<[1], [0], [0], [1], [0, 0, 1, 1], [], []>} : vector<96x12xbf16>, vector<12x16xbf16>, vector<96x16xf32> -> vector<96x16xf32>
    %c1_86 = arith.constant 1 : index
    %c0_87 = arith.constant 0 : index
    %c0_88 = arith.constant 0 : index
    %132 = vector.load %arg12[%c1_86, %c0_87, %c0_88] : memref<2x32x32xbf16, #tpu.memory_space<vmem>>, vector<1x32x32xbf16>
    %133 = vector.shape_cast %132 : vector<1x32x32xbf16> to vector<32x32xbf16>
    %cst_89 = arith.constant dense<0.000000e+00> : vector<96x32xf32>
    %134 = tpu.matmul %95, %133, %cst_89 {dimension_numbers = #tpu.dot_dimension_numbers<[1], [0], [0], [1], [0, 0, 1, 1], [], []>} : vector<96x32xbf16>, vector<32x32xbf16>, vector<96x32xf32> -> vector<96x32xf32>
    %135 = arith.truncf %131 : vector<96x16xf32> to vector<96x16xbf16>
    %c1_90 = arith.constant 1 : index
    %c0_91 = arith.constant 0 : index
    %c0_92 = arith.constant 0 : index
    %136 = vector.load %arg13[%c1_90, %c0_91, %c0_92] : memref<2x16x32xbf16, #tpu.memory_space<vmem>>, vector<1x16x32xbf16>
    %137 = vector.shape_cast %136 : vector<1x16x32xbf16> to vector<16x32xbf16>
    %cst_93 = arith.constant dense<0.000000e+00> : vector<96x32xf32>
    %138 = tpu.matmul %135, %137, %cst_93 {dimension_numbers = #tpu.dot_dimension_numbers<[1], [0], [0], [1], [0, 0, 1, 1], [], []>} : vector<96x16xbf16>, vector<16x32xbf16>, vector<96x32xf32> -> vector<96x32xf32>
    %139 = arith.addf %134, %138 : vector<96x32xf32>
    %c10 = arith.constant 10 : index
    %c0_94 = arith.constant 0 : index
    %140 = vector.load %arg16[%c10, %c0_94] : memref<12x32xf32, #tpu.memory_space<vmem>>, vector<1x32xf32>
    %141 = vector.broadcast %140 : vector<1x32xf32> to vector<96x32xf32>
    %142 = arith.addf %139, %141 : vector<96x32xf32>
    %cst_95 = arith.constant 0.00999999977 : f32
    %143 = vector.broadcast %cst_95 : f32 to vector<96x32xf32>
    %144 = arith.mulf %143, %142 : vector<96x32xf32>
    %145 = arith.maximumf %142, %144 : vector<96x32xf32>
    %146 = arith.truncf %145 : vector<96x32xf32> to vector<96x32xbf16>
    %c1_96 = arith.constant 1 : index
    %c0_97 = arith.constant 0 : index
    %c0_98 = arith.constant 0 : index
    %147 = vector.load %arg14[%c1_96, %c0_97, %c0_98] : memref<2x32x32xbf16, #tpu.memory_space<vmem>>, vector<1x32x32xbf16>
    %148 = vector.shape_cast %147 : vector<1x32x32xbf16> to vector<32x32xbf16>
    %cst_99 = arith.constant dense<0.000000e+00> : vector<96x32xf32>
    %149 = tpu.matmul %146, %148, %cst_99 {dimension_numbers = #tpu.dot_dimension_numbers<[1], [0], [0], [1], [0, 0, 1, 1], [], []>} : vector<96x32xbf16>, vector<32x32xbf16>, vector<96x32xf32> -> vector<96x32xf32>
    %c11 = arith.constant 11 : index
    %c0_100 = arith.constant 0 : index
    %150 = vector.load %arg16[%c11, %c0_100] : memref<12x32xf32, #tpu.memory_space<vmem>>, vector<1x32xf32>
    %151 = vector.broadcast %150 : vector<1x32xf32> to vector<96x32xf32>
    %152 = arith.addf %149, %151 : vector<96x32xf32>
    %153 = arith.addf %152, %94 : vector<96x32xf32>
    %cst_101 = arith.constant 0.00999999977 : f32
    %154 = vector.broadcast %cst_101 : f32 to vector<96x32xf32>
    %155 = arith.mulf %154, %153 : vector<96x32xf32>
    %156 = arith.maximumf %153, %155 : vector<96x32xf32>
    %157 = arith.addf %156, %13 : vector<96x32xf32>
    %158 = arith.truncf %157 : vector<96x32xf32> to vector<96x32xbf16>
    %c0_102 = arith.constant 0 : index
    %c0_103 = arith.constant 0 : index
    %159 = vector.load %arg15[%c0_102, %c0_103] : memref<32x4xbf16, #tpu.memory_space<vmem>>, vector<32x4xbf16>
    %cst_104 = arith.constant dense<0.000000e+00> : vector<96x4xf32>
    %160 = tpu.matmul %158, %159, %cst_104 {dimension_numbers = #tpu.dot_dimension_numbers<[1], [0], [0], [1], [0, 0, 1, 1], [], []>} : vector<96x32xbf16>, vector<32x4xbf16>, vector<96x4xf32> -> vector<96x4xf32>
    %c3 = arith.constant 3 : index
    %c0_105 = arith.constant 0 : index
    %161 = vector.load %arg16[%c3, %c0_105] : memref<12x32xf32, #tpu.memory_space<vmem>>, vector<1x4xf32>
    %162 = vector.broadcast %161 : vector<1x4xf32> to vector<96x4xf32>
    %163 = arith.addf %160, %162 : vector<96x4xf32>
    %c0_106 = arith.constant 0 : index
    %c0_107 = arith.constant 0 : index
    %c0_108 = arith.constant 0 : index
    %164 = vector.load %arg17[%c0_106, %c0_107, %c0_108] : memref<1x96x4xf32, #tpu.memory_space<vmem>>, vector<1x96x4xf32>
    %165 = vector.shape_cast %164 : vector<1x96x4xf32> to vector<96x4xf32>
    %166 = vector.shape_cast %163 : vector<96x4xf32> to vector<1x96x4xf32>
    tpu.vector_store %arg17[%c0_106, %c0_107, %c0_108], %166 {strides = array<i32>} : memref<1x96x4xf32, #tpu.memory_space<vmem>>, vector<1x96x4xf32>,
    return
  }
  func.func @transform_0(%arg0: i32) -> (i32, i32, i32) {
    %c0_i32 = arith.constant 0 : i32
    %c0_i32_0 = arith.constant 0 : i32
    %c0_i32_1 = arith.constant 0 : i32
    return %arg0, %c0_i32, %c0_i32_0 : i32, i32, i32
  }
  func.func @transform_1(%arg0: i32) -> (i32, i32, i32) {
    %c0_i32 = arith.constant 0 : i32
    %c0_i32_0 = arith.constant 0 : i32
    %c0_i32_1 = arith.constant 0 : i32
    return %arg0, %c0_i32, %c0_i32_0 : i32, i32, i32
  }
  func.func @transform_2(%arg0: i32) -> (i32, i32) {
    %c0_i32 = arith.constant 0 : i32
    %c0_i32_0 = arith.constant 0 : i32
    %c0_i32_1 = arith.constant 0 : i32
    return %c0_i32, %c0_i32_0 : i32, i32
  }
  func.func @transform_3(%arg0: i32) -> (i32, i32) {
    %c0_i32 = arith.constant 0 : i32
    %c0_i32_0 = arith.constant 0 : i32
    %c0_i32_1 = arith.constant 0 : i32
    return %c0_i32, %c0_i32_0 : i32, i32
  }
  func.func @transform_4(%arg0: i32) -> (i32, i32) {
    %c0_i32 = arith.constant 0 : i32
    %c0_i32_0 = arith.constant 0 : i32
    %c0_i32_1 = arith.constant 0 : i32
    return %c0_i32, %c0_i32_0 : i32, i32
  }
  func.func @transform_5(%arg0: i32) -> (i32, i32) {
    %c0_i32 = arith.constant 0 : i32
    %c0_i32_0 = arith.constant 0 : i32
    %c0_i32_1 = arith.constant 0 : i32
    return %c0_i32, %c0_i32_0 : i32, i32
  }
  func.func @transform_6(%arg0: i32) -> (i32, i32) {
    %c0_i32 = arith.constant 0 : i32
    %c0_i32_0 = arith.constant 0 : i32
    %c0_i32_1 = arith.constant 0 : i32
    return %c0_i32, %c0_i32_0 : i32, i32
  }
  func.func @transform_7(%arg0: i32) -> (i32, i32, i32) {
    %c0_i32 = arith.constant 0 : i32
    %c0_i32_0 = arith.constant 0 : i32
    %c0_i32_1 = arith.constant 0 : i32
    %c0_i32_2 = arith.constant 0 : i32
    return %c0_i32, %c0_i32_0, %c0_i32_1 : i32, i32, i32
  }
  func.func @transform_8(%arg0: i32) -> (i32, i32, i32) {
    %c0_i32 = arith.constant 0 : i32
    %c0_i32_0 = arith.constant 0 : i32
    %c0_i32_1 = arith.constant 0 : i32
    %c0_i32_2 = arith.constant 0 : i32
    return %c0_i32, %c0_i32_0, %c0_i32_1 : i32, i32, i32
  }
  func.func @transform_9(%arg0: i32) -> (i32, i32, i32) {
    %c0_i32 = arith.constant 0 : i32
    %c0_i32_0 = arith.constant 0 : i32
    %c0_i32_1 = arith.constant 0 : i32
    %c0_i32_2 = arith.constant 0 : i32
    return %c0_i32, %c0_i32_0, %c0_i32_1 : i32, i32, i32
  }
  func.func @transform_10(%arg0: i32) -> (i32, i32, i32) {
    %c0_i32 = arith.constant 0 : i32
    %c0_i32_0 = arith.constant 0 : i32
    %c0_i32_1 = arith.constant 0 : i32
    %c0_i32_2 = arith.constant 0 : i32
    return %c0_i32, %c0_i32_0, %c0_i32_1 : i32, i32, i32
  }
  func.func @transform_11(%arg0: i32) -> (i32, i32, i32) {
    %c0_i32 = arith.constant 0 : i32
    %c0_i32_0 = arith.constant 0 : i32
    %c0_i32_1 = arith.constant 0 : i32
    %c0_i32_2 = arith.constant 0 : i32
    return %c0_i32, %c0_i32_0, %c0_i32_1 : i32, i32, i32
  }
  func.func @transform_12(%arg0: i32) -> (i32, i32, i32) {
    %c0_i32 = arith.constant 0 : i32
    %c0_i32_0 = arith.constant 0 : i32
    %c0_i32_1 = arith.constant 0 : i32
    %c0_i32_2 = arith.constant 0 : i32
    return %c0_i32, %c0_i32_0, %c0_i32_1 : i32, i32, i32
  }
  func.func @transform_13(%arg0: i32) -> (i32, i32, i32) {
    %c0_i32 = arith.constant 0 : i32
    %c0_i32_0 = arith.constant 0 : i32
    %c0_i32_1 = arith.constant 0 : i32
    %c0_i32_2 = arith.constant 0 : i32
    return %c0_i32, %c0_i32_0, %c0_i32_1 : i32, i32, i32
  }
  func.func @transform_14(%arg0: i32) -> (i32, i32) {
    %c0_i32 = arith.constant 0 : i32
    %c0_i32_0 = arith.constant 0 : i32
    %c0_i32_1 = arith.constant 0 : i32
    return %c0_i32, %c0_i32_0 : i32, i32
  }
  func.func @transform_15(%arg0: i32) -> (i32, i32) {
    %c0_i32 = arith.constant 0 : i32
    %c0_i32_0 = arith.constant 0 : i32
    %c0_i32_1 = arith.constant 0 : i32
    return %c0_i32, %c0_i32_0 : i32, i32
  }
  func.func @transform_16(%arg0: i32) -> (i32, i32, i32) {
    %c0_i32 = arith.constant 0 : i32
    %c0_i32_0 = arith.constant 0 : i32
    %c0_i32_1 = arith.constant 0 : i32
    return %arg0, %c0_i32, %c0_i32_0 : i32, i32, i32
  }
}

</mosaic_0001>

<llo_original>
// kernel: tpu_custom_call.1
$region0: #{tpu_custom_call.1}
  #allocation0 [shape = 'u32[]', space=smem, size = 0x4, offset = 0x4, fixed_abs, tag = 'smem constant byte address 0x4 - core index']
  #allocation1 [shape = 'u32[72,128]{1,0:T(1,128)}', space=vmem, size = 0x9000, scoped, tag = 'internal scratch']
  %s0 = inlined_call_operand.vmem [shape: bf16[2,12,16], index: 0, kind: input, shape index: {}]
  %s1 = inlined_call_operand.vmem [shape: bf16[2,96,8], index: 1, kind: input, shape index: {}]
  %s2 = inlined_call_operand.vmem [shape: bf16[12,96], index: 2, kind: input, shape index: {}]
  %s3 = inlined_call_operand.vmem [shape: bf16[96,12], index: 3, kind: input, shape index: {}]
  %s4 = inlined_call_operand.vmem [shape: bf16[8,32], index: 4, kind: input, shape index: {}]
  %s5 = inlined_call_operand.vmem [shape: bf16[16,32], index: 5, kind: input, shape index: {}]
  %s6 = inlined_call_operand.vmem [shape: bf16[32,16], index: 6, kind: input, shape index: {}]
  %s7 = inlined_call_operand.vmem [shape: bf16[2,32,32], index: 7, kind: input, shape index: {}]
  %s8 = inlined_call_operand.vmem [shape: bf16[2,32,32], index: 8, kind: input, shape index: {}]
  %s9 = inlined_call_operand.vmem [shape: bf16[2,16,32], index: 9, kind: input, shape index: {}]
  %s10 = inlined_call_operand.vmem [shape: bf16[2,32,16], index: 10, kind: input, shape index: {}]
  %s11 = inlined_call_operand.vmem [shape: bf16[2,32,32], index: 11, kind: input, shape index: {}]
  %s12 = inlined_call_operand.vmem [shape: bf16[2,16,32], index: 12, kind: input, shape index: {}]
  %s13 = inlined_call_operand.vmem [shape: bf16[2,32,32], index: 13, kind: input, shape index: {}]
  %s14 = inlined_call_operand.vmem [shape: bf16[32,4], index: 14, kind: input, shape index: {}]
  %s15 = inlined_call_operand.vmem [shape: f32[12,32], index: 15, kind: input, shape index: {}]
  %s16 = inlined_call_operand.vmem [shape: f32[2,96,4], index: 16, kind: output, shape index: {}]
  %s17 = sld [smem:[#allocation0]]
  $region97: #{tpu_custom_call.1} parent=0
    _
  %s19 = ssub.s32 1, %s17
  %s20 = scalar_select 0, %s19, %s17
  loop: start=0, step=1, limit=4
  $region2: #{tpu_custom_call.1} parent=0 // loop_pre_header
    _
  $region3: #{tpu_custom_call.1} parent=0 // loop_header
    %s22 = sphi 0, %s26
    %p23 = scmp.ge.s32.totalorder %s22, 4
    %s32 = sphi 0, %s34
    %s35 = sphi 0, %s32
    %s36 = sphi 0, %s35
    %s52 = sphi 0, %s36
    %s58 = sphi 0, %s60
    %s61 = sphi 0, %s58
    %s62 = sphi 0, %s61
    %s78 = sphi 0, %s62
    %s82 = sphi 0, %s82
    %s84 = sphi 0, %s82
    %s85 = sphi 0, %s84
    %s99 = sphi 0, %s85
    %s103 = sphi 0, %s103
    %s105 = sphi 0, %s103
    %s106 = sphi 0, %s105
    %s120 = sphi 0, %s106
    %s124 = sphi 0, %s124
    %s126 = sphi 0, %s124
    %s127 = sphi 0, %s126
    %s141 = sphi 0, %s127
    %s145 = sphi 0, %s145
    %s147 = sphi 0, %s145
    %s148 = sphi 0, %s147
    %s162 = sphi 0, %s148
    %s166 = sphi 0, %s166
    %s168 = sphi 0, %s166
    %s169 = sphi 0, %s168
    %s183 = sphi 0, %s169
    %s187 = sphi 0, %s187
    %s189 = sphi 0, %s187
    %s190 = sphi 0, %s189
    %s204 = sphi 0, %s190
    %s208 = sphi 0, %s208
    %s210 = sphi 0, %s208
    %s211 = sphi 0, %s210
    %s225 = sphi 0, %s211
    %s229 = sphi 0, %s229
    %s231 = sphi 0, %s229
    %s232 = sphi 0, %s231
    %s246 = sphi 0, %s232
    %s250 = sphi 0, %s250
    %s252 = sphi 0, %s250
    %s253 = sphi 0, %s252
    %s267 = sphi 0, %s253
    %s271 = sphi 0, %s271
    %s273 = sphi 0, %s271
    %s274 = sphi 0, %s273
    %s288 = sphi 0, %s274
    %s292 = sphi 0, %s292
    %s294 = sphi 0, %s292
    %s295 = sphi 0, %s294
    %s309 = sphi 0, %s295
    %s313 = sphi 0, %s313
    %s315 = sphi 0, %s313
    %s316 = sphi 0, %s315
    %s330 = sphi 0, %s316
    %s334 = sphi 0, %s334
    %s336 = sphi 0, %s334
    %s337 = sphi 0, %s336
    %s351 = sphi 0, %s337
    %s355 = sphi 0, %s355
    %s357 = sphi 0, %s355
    %s358 = sphi 0, %s357
    %s372 = sphi 0, %s358
    %s378 = sphi 0, %s380
    %s381 = sphi 0, %s378
    %s382 = sphi 0, %s381
    %s398 = sphi 0, %s382
  $region4: #{tpu_custom_call.1} parent=0 // loop_header_branch
    %25 = sbr.rel (%p23) target = $region8
  $region5: #{tpu_custom_call.1} parent=0 // loop_body
    %s27 = ssub.s32 %s22, 1
    %s28 = ssub.s32 %s22, 2
    %s29 = sadd.s32 %s22, 1
    %s30 = ssub.s32 %s22, %s29
    %p31 = scmp.eq.s32.totalorder %s30, 0
    %s33 = sadd.s32 %s32, 1
    %s34 = scalar_select %p31, %s32, %s33
    %p37 = pneg %p31
    %p38 = scmp.eq.s32.totalorder %s22, 1
    %p39 = por %p37, %p38
    %p40 = scmp.ne.s32.totalorder %s32, %s35
    %p41 = scmp.eq.s32.totalorder %s22, 0
    %p42 = por %p40, %p41
    %p43 = scmp.ne.s32.totalorder %s32, %s35
    %p44 = scmp.eq.s32.totalorder %s27, 1
    %p45 = por %p43, %p44
    %p46 = scmp.ne.s32.totalorder %s35, %s36
    %p47 = scmp.eq.s32.totalorder %s27, 0
    %p48 = por %p46, %p47
    %p49 = scmp.ne.s32.totalorder %s35, %s36
    %p50 = scmp.eq.s32.totalorder %s28, 1
    %p51 = por %p49, %p50
    %p53 = scmp.ne.s32.totalorder %s36, %s52
    %p54 = scmp.eq.s32.totalorder %s28, 0
    %p55 = por %p53, %p54
    %s56 = ssub.s32 %s22, %s29
    %p57 = scmp.eq.s32.totalorder %s56, 0
    %s59 = sadd.s32 %s58, 1
    %s60 = scalar_select %p57, %s58, %s59
    %p63 = pneg %p57
    %p64 = scmp.eq.s32.totalorder %s22, 1
    %p65 = por %p63, %p64
    %p66 = scmp.ne.s32.totalorder %s58, %s61
    %p67 = scmp.eq.s32.totalorder %s22, 0
    %p68 = por %p66, %p67
    %p69 = scmp.ne.s32.totalorder %s58, %s61
    %p70 = scmp.eq.s32.totalorder %s27, 1
    %p71 = por %p69, %p70
    %p72 = scmp.ne.s32.totalorder %s61, %s62
    %p73 = scmp.eq.s32.totalorder %s27, 0
    %p74 = por %p72, %p73
    %p75 = scmp.ne.s32.totalorder %s61, %s62
    %p76 = scmp.eq.s32.totalorder %s28, 1
    %p77 = por %p75, %p76
    %p79 = scmp.ne.s32.totalorder %s62, %s78
    %p80 = scmp.eq.s32.totalorder %s28, 0
    %p81 = por %p79, %p80
    %s83 = sadd.s32 %s82, 1
    %p86 = scmp.eq.s32.totalorder %s22, 1
    %p87 = scmp.ne.s32.totalorder %s82, %s84
    %p88 = scmp.eq.s32.totalorder %s22, 0
    %p89 = por %p87, %p88
    %p90 = scmp.ne.s32.totalorder %s82, %s84
    %p91 = scmp.eq.s32.totalorder %s27, 1
    %p92 = por %p90, %p91
    %p93 = scmp.ne.s32.totalorder %s84, %s85
    %p94 = scmp.eq.s32.totalorder %s27, 0
    %p95 = por %p93, %p94
    %p96 = scmp.ne.s32.totalorder %s84, %s85
    %p97 = scmp.eq.s32.totalorder %s28, 1
    %p98 = por %p96, %p97
    %p100 = scmp.ne.s32.totalorder %s85, %s99
    %p101 = scmp.eq.s32.totalorder %s28, 0
    %p102 = por %p100, %p101
    %s104 = sadd.s32 %s103, 1
    %p107 = scmp.eq.s32.totalorder %s22, 1
    %p108 = scmp.ne.s32.totalorder %s103, %s105
    %p109 = scmp.eq.s32.totalorder %s22, 0
    %p110 = por %p108, %p109
    %p111 = scmp.ne.s32.totalorder %s103, %s105
    %p112 = scmp.eq.s32.totalorder %s27, 1
    %p113 = por %p111, %p112
    %p114 = scmp.ne.s32.totalorder %s105, %s106
    %p115 = scmp.eq.s32.totalorder %s27, 0
    %p116 = por %p114, %p115
    %p117 = scmp.ne.s32.totalorder %s105, %s106
    %p118 = scmp.eq.s32.totalorder %s28, 1
    %p119 = por %p117, %p118
    %p121 = scmp.ne.s32.totalorder %s106, %s120
    %p122 = scmp.eq.s32.totalorder %s28, 0
    %p123 = por %p121, %p122
    %s125 = sadd.s32 %s124, 1
    %p128 = scmp.eq.s32.totalorder %s22, 1
    %p129 = scmp.ne.s32.totalorder %s124, %s126
    %p130 = scmp.eq.s32.totalorder %s22, 0
    %p131 = por %p129, %p130
    %p132 = scmp.ne.s32.totalorder %s124, %s126
    %p133 = scmp.eq.s32.totalorder %s27, 1
    %p134 = por %p132, %p133
    %p135 = scmp.ne.s32.totalorder %s126, %s127
    %p136 = scmp.eq.s32.totalorder %s27, 0
    %p137 = por %p135, %p136
    %p138 = scmp.ne.s32.totalorder %s126, %s127
    %p139 = scmp.eq.s32.totalorder %s28, 1
    %p140 = por %p138, %p139
    %p142 = scmp.ne.s32.totalorder %s127, %s141
    %p143 = scmp.eq.s32.totalorder %s28, 0
    %p144 = por %p142, %p143
    %s146 = sadd.s32 %s145, 1
    %p149 = scmp.eq.s32.totalorder %s22, 1
    %p150 = scmp.ne.s32.totalorder %s145, %s147
    %p151 = scmp.eq.s32.totalorder %s22, 0
    %p152 = por %p150, %p151
    %p153 = scmp.ne.s32.totalorder %s145, %s147
    %p154 = scmp.eq.s32.totalorder %s27, 1
    %p155 = por %p153, %p154
    %p156 = scmp.ne.s32.totalorder %s147, %s148
    %p157 = scmp.eq.s32.totalorder %s27, 0
    %p158 = por %p156, %p157
    %p159 = scmp.ne.s32.totalorder %s147, %s148
    %p160 = scmp.eq.s32.totalorder %s28, 1
    %p161 = por %p159, %p160
    %p163 = scmp.ne.s32.totalorder %s148, %s162
    %p164 = scmp.eq.s32.totalorder %s28, 0
    %p165 = por %p163, %p164
    %s167 = sadd.s32 %s166, 1
    %p170 = scmp.eq.s32.totalorder %s22, 1
    %p171 = scmp.ne.s32.totalorder %s166, %s168
    %p172 = scmp.eq.s32.totalorder %s22, 0
    %p173 = por %p171, %p172
    %p174 = scmp.ne.s32.totalorder %s166, %s168
    %p175 = scmp.eq.s32.totalorder %s27, 1
    %p176 = por %p174, %p175
    %p177 = scmp.ne.s32.totalorder %s168, %s169
    %p178 = scmp.eq.s32.totalorder %s27, 0
    %p179 = por %p177, %p178
    %p180 = scmp.ne.s32.totalorder %s168, %s169
    %p181 = scmp.eq.s32.totalorder %s28, 1
    %p182 = por %p180, %p181
    %p184 = scmp.ne.s32.totalorder %s169, %s183
    %p185 = scmp.eq.s32.totalorder %s28, 0
    %p186 = por %p184, %p185
    %s188 = sadd.s32 %s187, 1
    %p191 = scmp.eq.s32.totalorder %s22, 1
    %p192 = scmp.ne.s32.totalorder %s187, %s189
    %p193 = scmp.eq.s32.totalorder %s22, 0
    %p194 = por %p192, %p193
    %p195 = scmp.ne.s32.totalorder %s187, %s189
    %p196 = scmp.eq.s32.totalorder %s27, 1
    %p197 = por %p195, %p196
    %p198 = scmp.ne.s32.totalorder %s189, %s190
    %p199 = scmp.eq.s32.totalorder %s27, 0
    %p200 = por %p198, %p199
    %p201 = scmp.ne.s32.totalorder %s189, %s190
    %p202 = scmp.eq.s32.totalorder %s28, 1
    %p203 = por %p201, %p202
    %p205 = scmp.ne.s32.totalorder %s190, %s204
    %p206 = scmp.eq.s32.totalorder %s28, 0
    %p207 = por %p205, %p206
    %s209 = sadd.s32 %s208, 1
    %p212 = scmp.eq.s32.totalorder %s22, 1
    %p213 = scmp.ne.s32.totalorder %s208, %s210
    %p214 = scmp.eq.s32.totalorder %s22, 0
    %p215 = por %p213, %p214
    %p216 = scmp.ne.s32.totalorder %s208, %s210
    %p217 = scmp.eq.s32.totalorder %s27, 1
    %p218 = por %p216, %p217
    %p219 = scmp.ne.s32.totalorder %s210, %s211
    %p220 = scmp.eq.s32.totalorder %s27, 0
    %p221 = por %p219, %p220
    %p222 = scmp.ne.s32.totalorder %s210, %s211
    %p223 = scmp.eq.s32.totalorder %s28, 1
    %p224 = por %p222, %p223
    %p226 = scmp.ne.s32.totalorder %s211, %s225
    %p227 = scmp.eq.s32.totalorder %s28, 0
    %p228 = por %p226, %p227
    %s230 = sadd.s32 %s229, 1
    %p233 = scmp.eq.s32.totalorder %s22, 1
    %p234 = scmp.ne.s32.totalorder %s229, %s231
    %p235 = scmp.eq.s32.totalorder %s22, 0
    %p236 = por %p234, %p235
    %p237 = scmp.ne.s32.totalorder %s229, %s231
    %p238 = scmp.eq.s32.totalorder %s27, 1
    %p239 = por %p237, %p238
    %p240 = scmp.ne.s32.totalorder %s231, %s232
    %p241 = scmp.eq.s32.totalorder %s27, 0
    %p242 = por %p240, %p241
    %p243 = scmp.ne.s32.totalorder %s231, %s232
    %p244 = scmp.eq.s32.totalorder %s28, 1
    %p245 = por %p243, %p244
    %p247 = scmp.ne.s32.totalorder %s232, %s246
    %p248 = scmp.eq.s32.totalorder %s28, 0
    %p249 = por %p247, %p248
    %s251 = sadd.s32 %s250, 1
    %p254 = scmp.eq.s32.totalorder %s22, 1
    %p255 = scmp.ne.s32.totalorder %s250, %s252
    %p256 = scmp.eq.s32.totalorder %s22, 0
    %p257 = por %p255, %p256
    %p258 = scmp.ne.s32.totalorder %s250, %s252
    %p259 = scmp.eq.s32.totalorder %s27, 1
    %p260 = por %p258, %p259
    %p261 = scmp.ne.s32.totalorder %s252, %s253
    %p262 = scmp.eq.s32.totalorder %s27, 0
    %p263 = por %p261, %p262
    %p264 = scmp.ne.s32.totalorder %s252, %s253
    %p265 = scmp.eq.s32.totalorder %s28, 1
    %p266 = por %p264, %p265
    %p268 = scmp.ne.s32.totalorder %s253, %s267
    %p269 = scmp.eq.s32.totalorder %s28, 0
    %p270 = por %p268, %p269
    %s272 = sadd.s32 %s271, 1
    %p275 = scmp.eq.s32.totalorder %s22, 1
    %p276 = scmp.ne.s32.totalorder %s271, %s273
    %p277 = scmp.eq.s32.totalorder %s22, 0
    %p278 = por %p276, %p277
    %p279 = scmp.ne.s32.totalorder %s271, %s273
    %p280 = scmp.eq.s32.totalorder %s27, 1
    %p281 = por %p279, %p280
    %p282 = scmp.ne.s32.totalorder %s273, %s274
    %p283 = scmp.eq.s32.totalorder %s27, 0
    %p284 = por %p282, %p283
    %p285 = scmp.ne.s32.totalorder %s273, %s274
    %p286 = scmp.eq.s32.totalorder %s28, 1
    %p287 = por %p285, %p286
    %p289 = scmp.ne.s32.totalorder %s274, %s288
    %p290 = scmp.eq.s32.totalorder %s28, 0
    %p291 = por %p289, %p290
    %s293 = sadd.s32 %s292, 1
    %p296 = scmp.eq.s32.totalorder %s22, 1
    %p297 = scmp.ne.s32.totalorder %s292, %s294
    %p298 = scmp.eq.s32.totalorder %s22, 0
    %p299 = por %p297, %p298
    %p300 = scmp.ne.s32.totalorder %s292, %s294
    %p301 = scmp.eq.s32.totalorder %s27, 1
    %p302 = por %p300, %p301
    %p303 = scmp.ne.s32.totalorder %s294, %s295
    %p304 = scmp.eq.s32.totalorder %s27, 0
    %p305 = por %p303, %p304
    %p306 = scmp.ne.s32.totalorder %s294, %s295
    %p307 = scmp.eq.s32.totalorder %s28, 1
    %p308 = por %p306, %p307
    %p310 = scmp.ne.s32.totalorder %s295, %s309
    %p311 = scmp.eq.s32.totalorder %s28, 0
    %p312 = por %p310, %p311
    %s314 = sadd.s32 %s313, 1
    %p317 = scmp.eq.s32.totalorder %s22, 1
    %p318 = scmp.ne.s32.totalorder %s313, %s315
    %p319 = scmp.eq.s32.totalorder %s22, 0
    %p320 = por %p318, %p319
    %p321 = scmp.ne.s32.totalorder %s313, %s315
    %p322 = scmp.eq.s32.totalorder %s27, 1
    %p323 = por %p321, %p322
    %p324 = scmp.ne.s32.totalorder %s315, %s316
    %p325 = scmp.eq.s32.totalorder %s27, 0
    %p326 = por %p324, %p325
    %p327 = scmp.ne.s32.totalorder %s315, %s316
    %p328 = scmp.eq.s32.totalorder %s28, 1
    %p329 = por %p327, %p328
    %p331 = scmp.ne.s32.totalorder %s316, %s330
    %p332 = scmp.eq.s32.totalorder %s28, 0
    %p333 = por %p331, %p332
    %s335 = sadd.s32 %s334, 1
    %p338 = scmp.eq.s32.totalorder %s22, 1
    %p339 = scmp.ne.s32.totalorder %s334, %s336
    %p340 = scmp.eq.s32.totalorder %s22, 0
    %p341 = por %p339, %p340
    %p342 = scmp.ne.s32.totalorder %s334, %s336
    %p343 = scmp.eq.s32.totalorder %s27, 1
    %p344 = por %p342, %p343
    %p345 = scmp.ne.s32.totalorder %s336, %s337
    %p346 = scmp.eq.s32.totalorder %s27, 0
    %p347 = por %p345, %p346
    %p348 = scmp.ne.s32.totalorder %s336, %s337
    %p349 = scmp.eq.s32.totalorder %s28, 1
    %p350 = por %p348, %p349
    %p352 = scmp.ne.s32.totalorder %s337, %s351
    %p353 = scmp.eq.s32.totalorder %s28, 0
    %p354 = por %p352, %p353
    %s356 = sadd.s32 %s355, 1
    %p359 = scmp.eq.s32.totalorder %s22, 1
    %p360 = scmp.ne.s32.totalorder %s355, %s357
    %p361 = scmp.eq.s32.totalorder %s22, 0
    %p362 = por %p360, %p361
    %p363 = scmp.ne.s32.totalorder %s355, %s357
    %p364 = scmp.eq.s32.totalorder %s27, 1
    %p365 = por %p363, %p364
    %p366 = scmp.ne.s32.totalorder %s357, %s358
    %p367 = scmp.eq.s32.totalorder %s27, 0
    %p368 = por %p366, %p367
    %p369 = scmp.ne.s32.totalorder %s357, %s358
    %p370 = scmp.eq.s32.totalorder %s28, 1
    %p371 = por %p369, %p370
    %p373 = scmp.ne.s32.totalorder %s358, %s372
    %p374 = scmp.eq.s32.totalorder %s28, 0
    %p375 = por %p373, %p374
    %s376 = ssub.s32 %s22, %s29
    %p377 = scmp.eq.s32.totalorder %s376, 0
    %s379 = sadd.s32 %s378, 1
    %s380 = scalar_select %p377, %s378, %s379
    %p383 = pneg %p377
    %p384 = scmp.eq.s32.totalorder %s22, 1
    %p385 = por %p383, %p384
    %p386 = scmp.ne.s32.totalorder %s378, %s381
    %p387 = scmp.eq.s32.totalorder %s22, 0
    %p388 = por %p386, %p387
    %p389 = scmp.ne.s32.totalorder %s378, %s381
    %p390 = scmp.eq.s32.totalorder %s27, 1
    %p391 = por %p389, %p390
    %p392 = scmp.ne.s32.totalorder %s381, %s382
    %p393 = scmp.eq.s32.totalorder %s27, 0
    %p394 = por %p392, %p393
    %p395 = scmp.ne.s32.totalorder %s381, %s382
    %p396 = scmp.eq.s32.totalorder %s28, 1
    %p397 = por %p395, %p396
    %p399 = scmp.ne.s32.totalorder %s382, %s398
    %p400 = scmp.eq.s32.totalorder %s28, 0
    %p401 = por %p399, %p400
    %p402 = scmp.le.s32.totalorder 1, %s22
    %p403 = scmp.lt.s32.totalorder %s22, 3
    %p404 = pnand %p402, %p403
    %p405 = pneg %p404
    // Predicated region
    $region9: #{tpu_custom_call.1} parent=5 // pred_check
      _
    $region10: #{tpu_custom_call.1} parent=5 // pred_check_branch
      %407 = sbr.rel (%p404) target = $region12
    $region11: #{tpu_custom_call.1} parent=5 // pred_region
      %s408 = ssub.s32 %s22, 1
      // Predicated region
      $region13: #{tpu_custom_call.1} parent=11 // pred_check
        %p409 = pneg %p95
      $region14: #{tpu_custom_call.1} parent=11 // pred_check_branch
        %411 = sbr.rel (%p409) target = $region16
      $region15: #{tpu_custom_call.1} parent=11 // pred_region
        _
      $region16: #{tpu_custom_call.1} parent=11 // pred_fallthru
        _
      // Predicated region
      $region17: #{tpu_custom_call.1} parent=11 // pred_check
        %p412 = pneg %p116
      $region18: #{tpu_custom_call.1} parent=11 // pred_check_branch
        %414 = sbr.rel (%p412) target = $region20
      $region19: #{tpu_custom_call.1} parent=11 // pred_region
        _
      $region20: #{tpu_custom_call.1} parent=11 // pred_fallthru
        _
      // Predicated region
      $region21: #{tpu_custom_call.1} parent=11 // pred_check
        %p415 = pneg %p137
      $region22: #{tpu_custom_call.1} parent=11 // pred_check_branch
        %417 = sbr.rel (%p415) target = $region24
      $region23: #{tpu_custom_call.1} parent=11 // pred_region
        _
      $region24: #{tpu_custom_call.1} parent=11 // pred_fallthru
        _
      // Predicated region
      $region25: #{tpu_custom_call.1} parent=11 // pred_check
        %p418 = pneg %p158
      $region26: #{tpu_custom_call.1} parent=11 // pred_check_branch
        %420 = sbr.rel (%p418) target = $region28
      $region27: #{tpu_custom_call.1} parent=11 // pred_region
        _
      $region28: #{tpu_custom_call.1} parent=11 // pred_fallthru
        _
      // Predicated region
      $region29: #{tpu_custom_call.1} parent=11 // pred_check
        %p421 = pneg %p179
      $region30: #{tpu_custom_call.1} parent=11 // pred_check_branch
        %423 = sbr.rel (%p421) target = $region32
      $region31: #{tpu_custom_call.1} parent=11 // pred_region
        _
      $region32: #{tpu_custom_call.1} parent=11 // pred_fallthru
        _
      // Predicated region
      $region33: #{tpu_custom_call.1} parent=11 // pred_check
        %p424 = pneg %p200
      $region34: #{tpu_custom_call.1} parent=11 // pred_check_branch
        %426 = sbr.rel (%p424) target = $region36
      $region35: #{tpu_custom_call.1} parent=11 // pred_region
        _
      $region36: #{tpu_custom_call.1} parent=11 // pred_fallthru
        _
      // Predicated region
      $region37: #{tpu_custom_call.1} parent=11 // pred_check
        %p427 = pneg %p221
      $region38: #{tpu_custom_call.1} parent=11 // pred_check_branch
        %429 = sbr.rel (%p427) target = $region40
      $region39: #{tpu_custom_call.1} parent=11 // pred_region
        _
      $region40: #{tpu_custom_call.1} parent=11 // pred_fallthru
        _
      // Predicated region
      $region41: #{tpu_custom_call.1} parent=11 // pred_check
        %p430 = pneg %p242
      $region42: #{tpu_custom_call.1} parent=11 // pred_check_branch
        %432 = sbr.rel (%p430) target = $region44
      $region43: #{tpu_custom_call.1} parent=11 // pred_region
        _
      $region44: #{tpu_custom_call.1} parent=11 // pred_fallthru
        _
      // Predicated region
      $region45: #{tpu_custom_call.1} parent=11 // pred_check
        %p433 = pneg %p263
      $region46: #{tpu_custom_call.1} parent=11 // pred_check_branch
        %435 = sbr.rel (%p433) target = $region48
      $region47: #{tpu_custom_call.1} parent=11 // pred_region
        _
      $region48: #{tpu_custom_call.1} parent=11 // pred_fallthru
        _
      // Predicated region
      $region49: #{tpu_custom_call.1} parent=11 // pred_check
        %p436 = pneg %p284
      $region50: #{tpu_custom_call.1} parent=11 // pred_check_branch
        %438 = sbr.rel (%p436) target = $region52
      $region51: #{tpu_custom_call.1} parent=11 // pred_region
        _
      $region52: #{tpu_custom_call.1} parent=11 // pred_fallthru
        _
      // Predicated region
      $region53: #{tpu_custom_call.1} parent=11 // pred_check
        %p439 = pneg %p305
      $region54: #{tpu_custom_call.1} parent=11 // pred_check_branch
        %441 = sbr.rel (%p439) target = $region56
      $region55: #{tpu_custom_call.1} parent=11 // pred_region
        _
      $region56: #{tpu_custom_call.1} parent=11 // pred_fallthru
        _
      // Predicated region
      $region57: #{tpu_custom_call.1} parent=11 // pred_check
        %p442 = pneg %p326
      $region58: #{tpu_custom_call.1} parent=11 // pred_check_branch
        %444 = sbr.rel (%p442) target = $region60
      $region59: #{tpu_custom_call.1} parent=11 // pred_region
        _
      $region60: #{tpu_custom_call.1} parent=11 // pred_fallthru
        _
      // Predicated region
      $region61: #{tpu_custom_call.1} parent=11 // pred_check
        %p445 = pneg %p347
      $region62: #{tpu_custom_call.1} parent=11 // pred_check_branch
        %447 = sbr.rel (%p445) target = $region64
      $region63: #{tpu_custom_call.1} parent=11 // pred_region
        _
      $region64: #{tpu_custom_call.1} parent=11 // pred_fallthru
        _
      // Predicated region
      $region65: #{tpu_custom_call.1} parent=11 // pred_check
        %p448 = pneg %p368
      $region66: #{tpu_custom_call.1} parent=11 // pred_check_branch
        %450 = sbr.rel (%p448) target = $region68
      $region67: #{tpu_custom_call.1} parent=11 // pred_region
        _
      $region68: #{tpu_custom_call.1} parent=11 // pred_fallthru
        _
    $region12: #{tpu_custom_call.1} parent=5 // pred_fallthru
      _
    %p451 = scmp.lt.s32.totalorder %s22, 2
    // Predicated region
    $region69: #{tpu_custom_call.1} parent=5 // pred_check
      %p452 = pneg %p451
    $region70: #{tpu_custom_call.1} parent=5 // pred_check_branch
      %454 = sbr.rel (%p452) target = $region72
    $region71: #{tpu_custom_call.1} parent=5 // pred_region
      // Predicated region
      $region73: #{tpu_custom_call.1} parent=71 // pred_check
        %p455 = pneg %p42
      $region74: #{tpu_custom_call.1} parent=71 // pred_check_branch
        %457 = sbr.rel (%p455) target = $region76
      $region75: #{tpu_custom_call.1} parent=71 // pred_region
        %p458 = scmp.lt.s32.totalorder %s22, 1
        %s459 = scalar_select %p458, %s22, 1
        %s460 = smul.addr %s459, 2
        %s461 = smul.addr %s460, 4
        %s462 = scalar_lea.vmem %s0, %s461
      $region76: #{tpu_custom_call.1} parent=71 // pred_fallthru
        _
      // Predicated region
      $region77: #{tpu_custom_call.1} parent=71 // pred_check
        %p463 = pneg %p68
      $region78: #{tpu_custom_call.1} parent=71 // pred_check_branch
        %465 = sbr.rel (%p463) target = $region80
      $region79: #{tpu_custom_call.1} parent=71 // pred_region
        %p466 = scmp.lt.s32.totalorder %s22, 1
        %s467 = scalar_select %p466, %s22, 1
        %s468 = smul.addr %s467, 12
        %s469 = smul.addr %s468, 4
        %s470 = scalar_lea.vmem %s1, %s469
      $region80: #{tpu_custom_call.1} parent=71 // pred_fallthru
        _
    $region72: #{tpu_custom_call.1} parent=5 // pred_fallthru
      _
    %p471 = scmp.le.s32.totalorder 1, %s22
    %p472 = scmp.lt.s32.totalorder %s22, 3
    %p473 = pnand %p471, %p472
    %p474 = pneg %p473
    // Predicated region
    $region81: #{tpu_custom_call.1} parent=5 // pred_check
      _
    $region82: #{tpu_custom_call.1} parent=5 // pred_check_branch
      %476 = sbr.rel (%p473) target = $region84
    $region83: #{tpu_custom_call.1} parent=5 // pred_region
      %s477 = ssub.s32 %s22, 1
      %p478 = scmp.lt.s32.totalorder %s27, 1
      %s479 = scalar_select %p478, %s27, 1
      %s480 = smul.addr %s479, 2
      %s481 = smul.addr %s480, 4
      %s482 = scalar_lea.vmem %s0, %s481
      %p483 = pneg %p48
      %p484 = pneg %p45
      %p485 = scmp.lt.s32.totalorder %s27, 1
      %s486 = scalar_select %p485, %s27, 1
      %s487 = smul.addr %s486, 12
      %s488 = smul.addr %s487, 4
      %s489 = scalar_lea.vmem %s1, %s488
      %p490 = pneg %p74
      %p491 = pneg %p71
      %p492 = pneg %p95
      %p493 = pneg %p92
      %p494 = pneg %p116
      %p495 = pneg %p113
      %p496 = pneg %p137
      %p497 = pneg %p134
      %p498 = pneg %p158
      %p499 = pneg %p155
      %p500 = pneg %p179
      %p501 = pneg %p176
      %p502 = pneg %p200
      %p503 = pneg %p197
      %p504 = pneg %p221
      %p505 = pneg %p218
      %p506 = pneg %p242
      %p507 = pneg %p239
      %p508 = pneg %p263
      %p509 = pneg %p260
      %p510 = pneg %p284
      %p511 = pneg %p281
      %p512 = pneg %p305
      %p513 = pneg %p302
      %p514 = pneg %p326
      %p515 = pneg %p323
      %p516 = pneg %p347
      %p517 = pneg %p344
      %p518 = pneg %p368
      %p519 = pneg %p365
      %p520 = pneg %p394
      %p521 = pneg %p391
      %p522 = scmp.lt.s32.totalorder %s27, 1
      %s523 = scalar_select %p522, %s27, 1
      %s524 = smul.addr %s523, 12
      %s525 = smul.addr %s524, 8
      %s526 = scalar_lea.vmem %s16, %s525
      %p527 = scmp.lt.s32.totalorder %s27, 1
      %s528 = scalar_select %p527, %s27, 1
      %s529 = smul.addr %s528, 2
      %s530 = smul.addr %s529, 4
      %s531 = scalar_lea.vmem %s0, %s530
      %p532 = scmp.lt.s32.totalorder %s27, 1
      %s533 = scalar_select %p532, %s27, 1
      %s534 = smul.addr %s533, 12
      %s535 = smul.addr %s534, 4
      %s536 = scalar_lea.vmem %s1, %s535
      %p537 = scmp.lt.s32.totalorder %s27, 1
      %s538 = scalar_select %p537, %s27, 1
      %s539 = smul.addr %s538, 12
      %s540 = smul.addr %s539, 8
      %s541 = scalar_lea.vmem %s16, %s540
      %v543 = vld [vmem:[%s2] sm:$0xf]
      %v544 = vld [vmem:[%s2 + $0x4] sm:$0x3]
      %v545 = vld [vmem:[%s3] sm:$0xf]
      %v546 = vld [vmem:[%s3 + $0x4] sm:$0xf]
      %v547 = vld [vmem:[%s3 + $0x8] sm:$0xf]
      %v548 = vld [vmem:[%s3 + $0xc] sm:$0xf]
      %v549 = vld [vmem:[%s3 + $0x10] sm:$0xf]
      %v550 = vld [vmem:[%s3 + $0x14] sm:$0xf]
      %v551 = vld [vmem:[%s3 + $0x18] sm:$0xf]
      %v552 = vld [vmem:[%s3 + $0x1c] sm:$0xf]
      %v553 = vld [vmem:[%s3 + $0x20] sm:$0xf]
      %v554 = vld [vmem:[%s3 + $0x24] sm:$0xf]
      %v555 = vld [vmem:[%s3 + $0x28] sm:$0xf]
      %v556 = vld [vmem:[%s3 + $0x2c] sm:$0xf]
      %v557 = vld [vmem:[%s536] sm:$0xf]
      %v558 = vld [vmem:[%s536 + $0x4] sm:$0xf]
      %v559 = vld [vmem:[%s536 + $0x8] sm:$0xf]
      %v560 = vld [vmem:[%s536 + $0xc] sm:$0xf]
      %v561 = vld [vmem:[%s536 + $0x10] sm:$0xf]
      %v562 = vld [vmem:[%s536 + $0x14] sm:$0xf]
      %v563 = vld [vmem:[%s536 + $0x18] sm:$0xf]
      %v564 = vld [vmem:[%s536 + $0x1c] sm:$0xf]
      %v565 = vld [vmem:[%s536 + $0x20] sm:$0xf]
      %v566 = vld [vmem:[%s536 + $0x24] sm:$0xf]
      %v567 = vld [vmem:[%s536 + $0x28] sm:$0xf]
      %v568 = vld [vmem:[%s536 + $0x2c] sm:$0xf]
      %v569 = vld [vmem:[%s531] sm:$0xf]
      %v570 = vld [vmem:[%s531 + $0x4] sm:$0x3]
      %v571 = vld [vmem:[%s4] sm:$0xf]
      %v572 = vld [vmem:[%s15] sm:$0x1]
      %v573 = vperm.slane %v572, 0
      %v586 = vunpack.c.l.b16 %v557
      %v587 = vunpack.c.l.b16 %v558
      %v588 = vunpack.c.l.b16 %v559
      %v589 = vunpack.c.l.b16 %v560
      %v590 = vunpack.c.l.b16 %v561
      %v591 = vunpack.c.l.b16 %v562
      %v592 = vunpack.c.l.b16 %v563
      %v593 = vunpack.c.l.b16 %v564
      %v594 = vunpack.c.l.b16 %v565
      %v595 = vunpack.c.l.b16 %v566
      %v596 = vunpack.c.l.b16 %v567
      %v597 = vunpack.c.l.b16 %v568
      %v598 = vpack.c.b16 %v587, %v586
      %v599 = vpack.c.b16 %v589, %v588
      %v600 = vpack.c.b16 %v591, %v590
      %v601 = vpack.c.b16 %v593, %v592
      %v602 = vpack.c.b16 %v595, %v594
      %v603 = vpack.c.b16 %v597, %v596
      %vm604 = vcmask 64512
      %v606 = vsel %vm604, %v598, 0
      %v609 = vsel %vm604, %v599, 0
      %v612 = vsel %vm604, %v600, 0
      %v615 = vsel %vm604, %v601, 0
      %v618 = vsel %vm604, %v602, 0
      %v621 = vsel %vm604, %v603, 0
      %vm623 = vcmask 1043456
      %v625 = vsel %vm623, %v571, 0
      %627 = vmatpush.bf16.msra.mxu0 0
      %628 = vmatpush.bf16.msra.mxu0 0
      %629 = vmatpush.bf16.msra.mxu0 0
      %630 = vmatpush.bf16.msra.mxu0 0
      %631 = vmatpush.bf16.msra.mxu0 0
      %632 = vmatpush.bf16.msra.mxu0 0
      %633 = vmatpush.bf16.msra.mxu0 0
      %634 = vmatpush.bf16.msra.mxu0 %v625
      %635 = vmatmul.bf16.gmra.mxu0 %v606
      %v636 = vpop.f32.mrf.mxu0
      %v637 = vadd.f32 %v573, %v636
      %v638 = vpop.f32.mrf.mxu0
      %v639 = vadd.f32 %v573, %v638
      %640 = vmatmul.bf16.gmra.mxu0 %v609
      %v641 = vpop.f32.mrf.mxu0
      %v642 = vadd.f32 %v573, %v641
      %v643 = vpop.f32.mrf.mxu0
      %v644 = vadd.f32 %v573, %v643
      %645 = vmatmul.bf16.gmra.mxu0 %v612
      %v646 = vpop.f32.mrf.mxu0
      %v647 = vadd.f32 %v573, %v646
      %v648 = vpop.f32.mrf.mxu0
      %v649 = vadd.f32 %v573, %v648
      %650 = vmatmul.bf16.gmra.mxu0 %v615
      %v651 = vpop.f32.mrf.mxu0
      %v652 = vadd.f32 %v573, %v651
      %v653 = vpop.f32.mrf.mxu0
      %v654 = vadd.f32 %v573, %v653
      %655 = vmatmul.bf16.gmra.mxu0 %v618
      %v656 = vpop.f32.mrf.mxu0
      %v657 = vadd.f32 %v573, %v656
      %v658 = vpop.f32.mrf.mxu0
      %v659 = vadd.f32 %v573, %v658
      %660 = vmatmul.bf16.gmra.mxu0 %v621
      %v661 = vpop.f32.mrf.mxu0
      %v662 = vadd.f32 %v573, %v661
      %v663 = vpop.f32.mrf.mxu0
      %v664 = vadd.f32 %v573, %v663
      %665 = vdwg.mxu0
      %v666 = vmul.f32 %v637, 0.01
      %v667 = vmul.f32 %v639, 0.01
      %v668 = vmul.f32 %v642, 0.01
      %v669 = vmul.f32 %v644, 0.01
      %v670 = vmul.f32 %v647, 0.01
      %v671 = vmul.f32 %v649, 0.01
      %v672 = vmul.f32 %v652, 0.01
      %v673 = vmul.f32 %v654, 0.01
      %v674 = vmul.f32 %v657, 0.01
      %v675 = vmul.f32 %v659, 0.01
      %v676 = vmul.f32 %v662, 0.01
      %v677 = vmul.f32 %v664, 0.01
      %v678 = vmax.f32 %v637, %v666
      %v679 = vmax.f32 %v639, %v667
      %v680 = vmax.f32 %v642, %v668
      %v681 = vmax.f32 %v644, %v669
      %v682 = vmax.f32 %v647, %v670
      %v683 = vmax.f32 %v649, %v671
      %v684 = vmax.f32 %v652, %v672
      %v685 = vmax.f32 %v654, %v673
      %v686 = vmax.f32 %v657, %v674
      %v687 = vmax.f32 %v659, %v675
      %v688 = vmax.f32 %v662, %v676
      %v689 = vmax.f32 %v664, %v677
      %v690 = vld [vmem:[%s5] sm:$0xf]
      %v691 = vld [vmem:[%s5 + $0x4] sm:$0xf]
      %v692 = vld [vmem:[%s15 + $0x1] sm:$0x1]
      %v693 = vperm.slane %v692, 0
      %v696 = vunpack.c.l.b16 %v569
      %v697 = vunpack.c.l.b16 %v570
      %v698 = vpack.c.b16 %v697, %v696
      %v701 = vunpack.c.l.b16 %v690
      %v702 = vunpack.c.l.b16 %v691
      %v703 = vpack.c.b16 %v702, %v701
      %vm705 = vcmask 130048
      %v707 = vsel %vm705, %v698, 0
      %709 = vmatpush.bf16.msra.mxu0 0
      %710 = vmatpush.bf16.msra.mxu0 0
      %711 = vmatpush.bf16.msra.mxu0 0
      %712 = vmatpush.bf16.msra.mxu0 0
      %713 = vmatpush.bf16.msra.mxu0 0
      %714 = vmatpush.bf16.msra.mxu0 0
      %715 = vmatpush.bf16.msra.mxu0 0
      %716 = vmatpush.bf16.msra.mxu0 %v703
      %717 = vmatmul.bf16.gmra.mxu0 %v707
      %v718 = vpop.f32.mrf.mxu0
      %v719 = vadd.f32 %v693, %v718
      %v720 = vpop.f32.mrf.mxu0
      %v721 = vadd.f32 %v693, %v720
      %722 = vdwg.mxu0
      %v723 = vmul.f32 %v719, 0.01
      %v724 = vmul.f32 %v721, 0.01
      %v725 = vmax.f32 %v719, %v723
      %v726 = vmax.f32 %v721, %v724
      %v727 = vpack.c.bf16 %v726, %v725
      %v728 = vld [vmem:[%s6] sm:$0xf]
      %v729 = vld [vmem:[%s6 + $0x4] sm:$0xf]
      %v730 = vld [vmem:[%s6 + $0x8] sm:$0xf]
      %v731 = vld [vmem:[%s6 + $0xc] sm:$0xf]
      %v732 = vld [vmem:[%s15 + $0x2] sm:$0x1]
      %v733 = vperm.slane %v732, 0
      %v738 = vunpack.c.l.b16 %v728
      %v739 = vunpack.c.l.b16 %v729
      %v740 = vunpack.c.l.b16 %v730
      %v741 = vunpack.c.l.b16 %v731
      %v742 = vpack.c.b16 %v739, %v738
      %v743 = vpack.c.b16 %v741, %v740
      %vm746 = vcmask 261120
      %v748 = vsel %vm746, %v727, 0
      %750 = vmatpush.bf16.msra.mxu0 0
      %751 = vmatpush.bf16.msra.mxu0 0
      %752 = vmatpush.bf16.msra.mxu0 0
      %753 = vmatpush.bf16.msra.mxu0 0
      %754 = vmatpush.bf16.msra.mxu0 0
      %755 = vmatpush.bf16.msra.mxu0 0
      %756 = vmatpush.bf16.msra.mxu0 %v743
      %757 = vmatpush.bf16.msra.mxu0 %v742
      %758 = vmatmul.bf16.gmra.mxu0 %v748
      %v759 = vpop.f32.mrf.mxu0
      %v760 = vadd.f32 %v733, %v759
      %v761 = vpop.f32.mrf.mxu0
      %v762 = vadd.f32 %v733, %v761
      %763 = vdwg.mxu0
      %v764 = vmul.f32 %v760, 0.01
      %v765 = vmul.f32 %v762, 0.01
      %v766 = vmax.f32 %v760, %v764
      %v767 = vmax.f32 %v762, %v765
      %v768 = vpack.c.bf16 %v679, %v678
      %v769 = vpack.c.bf16 %v681, %v680
      %v770 = vpack.c.bf16 %v683, %v682
      %v771 = vpack.c.bf16 %v685, %v684
      %v772 = vpack.c.bf16 %v687, %v686
      %v773 = vpack.c.bf16 %v689, %v688
      %v774 = vpack.c.bf16 %v767, %v766
      %v777 = vunpack.c.l.b16 %v543
      %v778 = vunpack.c.l.b16 %v544
      %v779 = vpack.c.b16 %v778, %v777
      %vm780 = vcmask 785408
      %v782 = vsel %vm780, %v779, 0
      %784 = vmatpush.bf16.msra.mxu0 0
      %785 = vmatpush.bf16.msra.mxu0 0
      %786 = vmatpush.bf16.msra.mxu0 %v773
      %787 = vmatpush.bf16.msra.mxu0 %v772
      %788 = vmatpush.bf16.msra.mxu0 %v771
      %789 = vmatpush.bf16.msra.mxu0 %v770
      %790 = vmatpush.bf16.msra.mxu0 %v769
      %791 = vmatpush.bf16.msra.mxu0 %v768
      %792 = vmatmul.bf16.gmra.mxu0 %v782
      %v793 = vpop.f32.mrf.mxu0
      %v794 = vadd.f32 0.0, %v793
      %v795 = vpop.f32.mrf.mxu0
      %v796 = vadd.f32 0.0, %v795
      %797 = vdwg.mxu0
      %v798 = vmul.f32 %v794, 0.125
      %v799 = vmul.f32 %v796, 0.125
      %v800 = vpack.c.bf16 %v799, %v798
      %v801 = vld [vmem:[%s7] sm:$0xf]
      %v802 = vld [vmem:[%s7 + $0x4] sm:$0xf]
      %v803 = vld [vmem:[%s7 + $0x8] sm:$0xf]
      %v804 = vld [vmem:[%s7 + $0xc] sm:$0xf]
      %v805 = vpack.c.bf16 %v796, %v794
      %v806 = vld [vmem:[%s8] sm:$0xf]
      %v807 = vld [vmem:[%s8 + $0x4] sm:$0xf]
      %v808 = vld [vmem:[%s8 + $0x8] sm:$0xf]
      %v809 = vld [vmem:[%s8 + $0xc] sm:$0xf]
      %v814 = vunpack.c.l.b16 %v806
      %v815 = vunpack.c.l.b16 %v807
      %v816 = vunpack.c.l.b16 %v808
      %v817 = vunpack.c.l.b16 %v809
      %v818 = vpack.c.b16 %v815, %v814
      %v819 = vpack.c.b16 %v817, %v816
      %v823 = vsel %vm746, %v805, 0
      %825 = vmatpush.bf16.msra.mxu0 0
      %826 = vmatpush.bf16.msra.mxu0 0
      %827 = vmatpush.bf16.msra.mxu0 0
      %828 = vmatpush.bf16.msra.mxu0 0
      %829 = vmatpush.bf16.msra.mxu0 0
      %830 = vmatpush.bf16.msra.mxu0 0
      %831 = vmatpush.bf16.msra.mxu0 %v819
      %832 = vmatpush.bf16.msra.mxu0 %v818
      %833 = vmatmul.bf16.gmra.mxu0 %v823
      %v834 = vpop.f32.mrf.mxu0
      %v835 = vadd.f32 0.0, %v834
      %v836 = vpop.f32.mrf.mxu0
      %v837 = vadd.f32 0.0, %v836
      %838 = vdwg.mxu0
      %v843 = vunpack.c.l.b16 %v801
      %v844 = vunpack.c.l.b16 %v802
      %v845 = vunpack.c.l.b16 %v803
      %v846 = vunpack.c.l.b16 %v804
      %v847 = vpack.c.b16 %v844, %v843
      %v848 = vpack.c.b16 %v846, %v845
      %v852 = vsel %vm746, %v800, 0
      %854 = vmatpush.bf16.msra.mxu0 0
      %855 = vmatpush.bf16.msra.mxu0 0
      %856 = vmatpush.bf16.msra.mxu0 0
      %857 = vmatpush.bf16.msra.mxu0 0
      %858 = vmatpush.bf16.msra.mxu0 0
      %859 = vmatpush.bf16.msra.mxu0 0
      %860 = vmatpush.bf16.msra.mxu0 %v848
      %861 = vmatpush.bf16.msra.mxu0 %v847
      %862 = vmatmul.bf16.gmra.mxu0 %v852
      %v863 = vpop.f32.mrf.mxu0
      %v864 = vadd.f32 %v835, %v863
      %v865 = vpop.f32.mrf.mxu0
      %v866 = vadd.f32 %v837, %v865
      %867 = vdwg.mxu0
      %v868 = vld [vmem:[%s9] sm:$0xf]
      %v869 = vld [vmem:[%s9 + $0x4] sm:$0xf]
      %v872 = vunpack.c.l.b16 %v868
      %v873 = vunpack.c.l.b16 %v869
      %v874 = vpack.c.b16 %v873, %v872
      %v877 = vsel %vm705, %v774, 0
      %879 = vmatpush.bf16.msra.mxu0 0
      %880 = vmatpush.bf16.msra.mxu0 0
      %881 = vmatpush.bf16.msra.mxu0 0
      %882 = vmatpush.bf16.msra.mxu0 0
      %883 = vmatpush.bf16.msra.mxu0 0
      %884 = vmatpush.bf16.msra.mxu0 0
      %885 = vmatpush.bf16.msra.mxu0 0
      %886 = vmatpush.bf16.msra.mxu0 %v874
      %887 = vmatmul.bf16.gmra.mxu0 %v877
      %v888 = vpop.f32.mrf.mxu0
      %v889 = vadd.f32 0.0, %v888
      %v890 = vpop.f32.mrf.mxu0
      %v891 = vadd.f32 0.0, %v890
      %892 = vdwg.mxu0
      %v893 = vadd.f32 %v864, %v889
      %v894 = vadd.f32 %v866, %v891
      %v895 = vld [vmem:[%s15 + $0x4] sm:$0x1]
      %v896 = vperm.slane %v895, 0
      %v897 = vadd.f32 %v893, %v896
      %v898 = vadd.f32 %v894, %v896
      %v899 = vmul.f32 %v897, 0.01
      %v900 = vmul.f32 %v898, 0.01
      %v901 = vmax.f32 %v897, %v899
      %v902 = vmax.f32 %v898, %v900
      %v903 = vpack.c.bf16 %v902, %v901
      %v904 = vld [vmem:[%s10] sm:$0xf]
      %v905 = vld [vmem:[%s10 + $0x4] sm:$0xf]
      %v906 = vld [vmem:[%s10 + $0x8] sm:$0xf]
      %v907 = vld [vmem:[%s10 + $0xc] sm:$0xf]
      %v908 = vld [vmem:[%s15 + $0x5] sm:$0x1]
      %v909 = vperm.slane %v908, 0
      %v914 = vunpack.c.l.b16 %v904
      %v915 = vunpack.c.l.b16 %v905
      %v916 = vunpack.c.l.b16 %v906
      %v917 = vunpack.c.l.b16 %v907
      %v918 = vpack.c.b16 %v915, %v914
      %v919 = vpack.c.b16 %v917, %v916
      %v923 = vsel %vm746, %v903, 0
      %925 = vmatpush.bf16.msra.mxu0 0
      %926 = vmatpush.bf16.msra.mxu0 0
      %927 = vmatpush.bf16.msra.mxu0 0
      %928 = vmatpush.bf16.msra.mxu0 0
      %929 = vmatpush.bf16.msra.mxu0 0
      %930 = vmatpush.bf16.msra.mxu0 0
      %931 = vmatpush.bf16.msra.mxu0 %v919
      %932 = vmatpush.bf16.msra.mxu0 %v918
      %933 = vmatmul.bf16.gmra.mxu0 %v923
      %v934 = vpop.f32.mrf.mxu0
      %v935 = vadd.f32 %v909, %v934
      %v936 = vpop.f32.mrf.mxu0
      %v937 = vadd.f32 %v909, %v936
      %938 = vdwg.mxu0
      %v939 = vadd.f32 %v935, %v766
      %v940 = vadd.f32 %v937, %v767
      %v941 = vmul.f32 %v939, 0.01
      %v942 = vmul.f32 %v940, 0.01
      %v943 = vmax.f32 %v939, %v941
      %v944 = vmax.f32 %v940, %v942
      %v945 = vpack.c.bf16 %v944, %v943
      %v958 = vunpack.c.l.b16 %v545
      %v959 = vunpack.c.l.b16 %v546
      %v960 = vunpack.c.l.b16 %v547
      %v961 = vunpack.c.l.b16 %v548
      %v962 = vunpack.c.l.b16 %v549
      %v963 = vunpack.c.l.b16 %v550
      %v964 = vunpack.c.l.b16 %v551
      %v965 = vunpack.c.l.b16 %v552
      %v966 = vunpack.c.l.b16 %v553
      %v967 = vunpack.c.l.b16 %v554
      %v968 = vunpack.c.l.b16 %v555
      %v969 = vunpack.c.l.b16 %v556
      %v970 = vpack.c.b16 %v959, %v958
      %v971 = vpack.c.b16 %v961, %v960
      %v972 = vpack.c.b16 %v963, %v962
      %v973 = vpack.c.b16 %v965, %v964
      %v974 = vpack.c.b16 %v967, %v966
      %v975 = vpack.c.b16 %v969, %v968
      %vm976 = vcmask 97280
      %v978 = vsel %vm976, %v970, 0
      %v981 = vsel %vm976, %v971, 0
      %v984 = vsel %vm976, %v972, 0
      %v987 = vsel %vm976, %v973, 0
      %v990 = vsel %vm976, %v974, 0
      %v993 = vsel %vm976, %v975, 0
      %vm995 = vcmask 1045504
      %v997 = vsel %vm995, %v945, 0
      %999 = vmatpush.bf16.msra.mxu0 0
      %1000 = vmatpush.bf16.msra.mxu0 0
      %1001 = vmatpush.bf16.msra.mxu0 0
      %1002 = vmatpush.bf16.msra.mxu0 0
      %1003 = vmatpush.bf16.msra.mxu0 0
      %1004 = vmatpush.bf16.msra.mxu0 0
      %1005 = vmatpush.bf16.msra.mxu0 0
      %1006 = vmatpush.bf16.msra.mxu0 %v997
      %1007 = vmatmul.bf16.gmra.mxu0 %v978
      %v1008 = vpop.f32.mrf.mxu0
      %v1009 = vadd.f32 0.0, %v1008
      %v1010 = vpop.f32.mrf.mxu0
      %v1011 = vadd.f32 0.0, %v1010
      %1012 = vmatmul.bf16.gmra.mxu0 %v981
      %v1013 = vpop.f32.mrf.mxu0
      %v1014 = vadd.f32 0.0, %v1013
      %v1015 = vpop.f32.mrf.mxu0
      %v1016 = vadd.f32 0.0, %v1015
      %1017 = vmatmul.bf16.gmra.mxu0 %v984
      %v1018 = vpop.f32.mrf.mxu0
      %v1019 = vadd.f32 0.0, %v1018
      %v1020 = vpop.f32.mrf.mxu0
      %v1021 = vadd.f32 0.0, %v1020
      %1022 = vmatmul.bf16.gmra.mxu0 %v987
      %v1023 = vpop.f32.mrf.mxu0
      %v1024 = vadd.f32 0.0, %v1023
      %v1025 = vpop.f32.mrf.mxu0
      %v1026 = vadd.f32 0.0, %v1025
      %1027 = vmatmul.bf16.gmra.mxu0 %v990
      %v1028 = vpop.f32.mrf.mxu0
      %v1029 = vadd.f32 0.0, %v1028
      %v1030 = vpop.f32.mrf.mxu0
      %v1031 = vadd.f32 0.0, %v1030
      %1032 = vmatmul.bf16.gmra.mxu0 %v993
      %v1033 = vpop.f32.mrf.mxu0
      %v1034 = vadd.f32 0.0, %v1033
      %v1035 = vpop.f32.mrf.mxu0
      %v1036 = vadd.f32 0.0, %v1035
      %1037 = vdwg.mxu0
      %v1038 = vld [vmem:[%s11] sm:$0xf]
      %v1039 = vld [vmem:[%s11 + $0x4] sm:$0xf]
      %v1040 = vld [vmem:[%s11 + $0x8] sm:$0xf]
      %v1041 = vld [vmem:[%s11 + $0xc] sm:$0xf]
      %v1042 = vpack.c.bf16 %v1011, %v1009
      %v1043 = vpack.c.bf16 %v1016, %v1014
      %v1044 = vpack.c.bf16 %v1021, %v1019
      %v1045 = vpack.c.bf16 %v1026, %v1024
      %v1046 = vpack.c.bf16 %v1031, %v1029
      %v1047 = vpack.c.bf16 %v1036, %v1034
      %v1048 = vld [vmem:[%s12] sm:$0xf]
      %v1049 = vld [vmem:[%s12 + $0x4] sm:$0xf]
      %v1052 = vunpack.c.l.b16 %v1048
      %v1053 = vunpack.c.l.b16 %v1049
      %v1054 = vpack.c.b16 %v1053, %v1052
      %v1057 = vsel %vm705, %v1042, 0
      %v1060 = vsel %vm705, %v1043, 0
      %v1063 = vsel %vm705, %v1044, 0
      %v1066 = vsel %vm705, %v1045, 0
      %v1069 = vsel %vm705, %v1046, 0
      %v1072 = vsel %vm705, %v1047, 0
      %1074 = vmatpush.bf16.msra.mxu0 0
      %1075 = vmatpush.bf16.msra.mxu0 0
      %1076 = vmatpush.bf16.msra.mxu0 0
      %1077 = vmatpush.bf16.msra.mxu0 0
      %1078 = vmatpush.bf16.msra.mxu0 0
      %1079 = vmatpush.bf16.msra.mxu0 0
      %1080 = vmatpush.bf16.msra.mxu0 0
      %1081 = vmatpush.bf16.msra.mxu0 %v1054
      %1082 = vmatmul.bf16.gmra.mxu0 %v1057
      %v1083 = vpop.f32.mrf.mxu0
      %v1084 = vadd.f32 0.0, %v1083
      %v1085 = vpop.f32.mrf.mxu0
      %v1086 = vadd.f32 0.0, %v1085
      %1087 = vmatmul.bf16.gmra.mxu0 %v1060
      %v1088 = vpop.f32.mrf.mxu0
      %v1089 = vadd.f32 0.0, %v1088
      %v1090 = vpop.f32.mrf.mxu0
      %v1091 = vadd.f32 0.0, %v1090
      %1092 = vmatmul.bf16.gmra.mxu0 %v1063
      %v1093 = vpop.f32.mrf.mxu0
      %v1094 = vadd.f32 0.0, %v1093
      %v1095 = vpop.f32.mrf.mxu0
      %v1096 = vadd.f32 0.0, %v1095
      %1097 = vmatmul.bf16.gmra.mxu0 %v1066
      %v1098 = vpop.f32.mrf.mxu0
      %v1099 = vadd.f32 0.0, %v1098
      %v1100 = vpop.f32.mrf.mxu0
      %v1101 = vadd.f32 0.0, %v1100
      %1102 = vmatmul.bf16.gmra.mxu0 %v1069
      %v1103 = vpop.f32.mrf.mxu0
      %v1104 = vadd.f32 0.0, %v1103
      %v1105 = vpop.f32.mrf.mxu0
      %v1106 = vadd.f32 0.0, %v1105
      %1107 = vmatmul.bf16.gmra.mxu0 %v1072
      %v1108 = vpop.f32.mrf.mxu0
      %v1109 = vadd.f32 0.0, %v1108
      %v1110 = vpop.f32.mrf.mxu0
      %v1111 = vadd.f32 0.0, %v1110
      %1112 = vdwg.mxu0
      %v1117 = vunpack.c.l.b16 %v1038
      %v1118 = vunpack.c.l.b16 %v1039
      %v1119 = vunpack.c.l.b16 %v1040
      %v1120 = vunpack.c.l.b16 %v1041
      %v1121 = vpack.c.b16 %v1118, %v1117
      %v1122 = vpack.c.b16 %v1120, %v1119
      %v1126 = vsel %vm746, %v768, 0
      %v1129 = vsel %vm746, %v769, 0
      %v1132 = vsel %vm746, %v770, 0
      %v1135 = vsel %vm746, %v771, 0
      %v1138 = vsel %vm746, %v772, 0
      %v1141 = vsel %vm746, %v773, 0
      %1143 = vmatpush.bf16.msra.mxu0 0
      %1144 = vmatpush.bf16.msra.mxu0 0
      %1145 = vmatpush.bf16.msra.mxu0 0
      %1146 = vmatpush.bf16.msra.mxu0 0
      %1147 = vmatpush.bf16.msra.mxu0 0
      %1148 = vmatpush.bf16.msra.mxu0 0
      %1149 = vmatpush.bf16.msra.mxu0 %v1122
      %1150 = vmatpush.bf16.msra.mxu0 %v1121
      %1151 = vmatmul.bf16.gmra.mxu0 %v1126
      %v1152 = vpop.f32.mrf.mxu0
      %v1153 = vadd.f32 %v1084, %v1152
      %v1154 = vpop.f32.mrf.mxu0
      %v1155 = vadd.f32 %v1086, %v1154
      %1156 = vmatmul.bf16.gmra.mxu0 %v1129
      %v1157 = vpop.f32.mrf.mxu0
      %v1158 = vadd.f32 %v1089, %v1157
      %v1159 = vpop.f32.mrf.mxu0
      %v1160 = vadd.f32 %v1091, %v1159
      %1161 = vmatmul.bf16.gmra.mxu0 %v1132
      %v1162 = vpop.f32.mrf.mxu0
      %v1163 = vadd.f32 %v1094, %v1162
      %v1164 = vpop.f32.mrf.mxu0
      %v1165 = vadd.f32 %v1096, %v1164
      %1166 = vmatmul.bf16.gmra.mxu0 %v1135
      %v1167 = vpop.f32.mrf.mxu0
      %v1168 = vadd.f32 %v1099, %v1167
      %v1169 = vpop.f32.mrf.mxu0
      %v1170 = vadd.f32 %v1101, %v1169
      %1171 = vmatmul.bf16.gmra.mxu0 %v1138
      %v1172 = vpop.f32.mrf.mxu0
      %v1173 = vadd.f32 %v1104, %v1172
      %v1174 = vpop.f32.mrf.mxu0
      %v1175 = vadd.f32 %v1106, %v1174
      %1176 = vmatmul.bf16.gmra.mxu0 %v1141
      %v1177 = vpop.f32.mrf.mxu0
      %v1178 = vadd.f32 %v1109, %v1177
      %v1179 = vpop.f32.mrf.mxu0
      %v1180 = vadd.f32 %v1111, %v1179
      %1181 = vdwg.mxu0
      %v1182 = vld [vmem:[%s15 + $0x6] sm:$0x1]
      %v1183 = vperm.slane %v1182, 0
      %v1184 = vadd.f32 %v1153, %v1183
      %v1185 = vadd.f32 %v1155, %v1183
      %v1186 = vadd.f32 %v1158, %v1183
      %v1187 = vadd.f32 %v1160, %v1183
      %v1188 = vadd.f32 %v1163, %v1183
      %v1189 = vadd.f32 %v1165, %v1183
      %v1190 = vadd.f32 %v1168, %v1183
      %v1191 = vadd.f32 %v1170, %v1183
      %v1192 = vadd.f32 %v1173, %v1183
      %v1193 = vadd.f32 %v1175, %v1183
      %v1194 = vadd.f32 %v1178, %v1183
      %v1195 = vadd.f32 %v1180, %v1183
      %v1196 = vmul.f32 %v1184, 0.01
      %v1197 = vmul.f32 %v1185, 0.01
      %v1198 = vmul.f32 %v1186, 0.01
      %v1199 = vmul.f32 %v1187, 0.01
      %v1200 = vmul.f32 %v1188, 0.01
      %v1201 = vmul.f32 %v1189, 0.01
      %v1202 = vmul.f32 %v1190, 0.01
      %v1203 = vmul.f32 %v1191, 0.01
      %v1204 = vmul.f32 %v1192, 0.01
      %v1205 = vmul.f32 %v1193, 0.01
      %v1206 = vmul.f32 %v1194, 0.01
      %v1207 = vmul.f32 %v1195, 0.01
      %v1208 = vmax.f32 %v1184, %v1196
      %v1209 = vmax.f32 %v1185, %v1197
      %v1210 = vmax.f32 %v1186, %v1198
      %v1211 = vmax.f32 %v1187, %v1199
      %v1212 = vmax.f32 %v1188, %v1200
      %v1213 = vmax.f32 %v1189, %v1201
      %v1214 = vmax.f32 %v1190, %v1202
      %v1215 = vmax.f32 %v1191, %v1203
      %v1216 = vmax.f32 %v1192, %v1204
      %v1217 = vmax.f32 %v1193, %v1205
      %v1218 = vmax.f32 %v1194, %v1206
      %v1219 = vmax.f32 %v1195, %v1207
      %v1220 = vpack.c.bf16 %v1209, %v1208
      %v1221 = vpack.c.bf16 %v1211, %v1210
      %v1222 = vpack.c.bf16 %v1213, %v1212
      %v1223 = vpack.c.bf16 %v1215, %v1214
      %v1224 = vpack.c.bf16 %v1217, %v1216
      %v1225 = vpack.c.bf16 %v1219, %v1218
      %v1226 = vld [vmem:[%s13] sm:$0xf]
      %v1227 = vld [vmem:[%s13 + $0x4] sm:$0xf]
      %v1228 = vld [vmem:[%s13 + $0x8] sm:$0xf]
      %v1229 = vld [vmem:[%s13 + $0xc] sm:$0xf]
      %v1230 = vld [vmem:[%s15 + $0x7] sm:$0x1]
      %v1231 = vperm.slane %v1230, 0
      %v1236 = vunpack.c.l.b16 %v1226
      %v1237 = vunpack.c.l.b16 %v1227
      %v1238 = vunpack.c.l.b16 %v1228
      %v1239 = vunpack.c.l.b16 %v1229
      %v1240 = vpack.c.b16 %v1237, %v1236
      %v1241 = vpack.c.b16 %v1239, %v1238
      %v1245 = vsel %vm746, %v1220, 0
      %v1248 = vsel %vm746, %v1221, 0
      %v1251 = vsel %vm746, %v1222, 0
      %v1254 = vsel %vm746, %v1223, 0
      %v1257 = vsel %vm746, %v1224, 0
      %v1260 = vsel %vm746, %v1225, 0
      %1262 = vmatpush.bf16.msra.mxu0 0
      %1263 = vmatpush.bf16.msra.mxu0 0
      %1264 = vmatpush.bf16.msra.mxu0 0
      %1265 = vmatpush.bf16.msra.mxu0 0
      %1266 = vmatpush.bf16.msra.mxu0 0
      %1267 = vmatpush.bf16.msra.mxu0 0
      %1268 = vmatpush.bf16.msra.mxu0 %v1241
      %1269 = vmatpush.bf16.msra.mxu0 %v1240
      %1270 = vmatmul.bf16.gmra.mxu0 %v1245
      %v1271 = vpop.f32.mrf.mxu0
      %v1272 = vadd.f32 %v1231, %v1271
      %v1273 = vpop.f32.mrf.mxu0
      %v1274 = vadd.f32 %v1231, %v1273
      %1275 = vmatmul.bf16.gmra.mxu0 %v1248
      %v1276 = vpop.f32.mrf.mxu0
      %v1277 = vadd.f32 %v1231, %v1276
      %v1278 = vpop.f32.mrf.mxu0
      %v1279 = vadd.f32 %v1231, %v1278
      %1280 = vmatmul.bf16.gmra.mxu0 %v1251
      %v1281 = vpop.f32.mrf.mxu0
      %v1282 = vadd.f32 %v1231, %v1281
      %v1283 = vpop.f32.mrf.mxu0
      %v1284 = vadd.f32 %v1231, %v1283
      %1285 = vmatmul.bf16.gmra.mxu0 %v1254
      %v1286 = vpop.f32.mrf.mxu0
      %v1287 = vadd.f32 %v1231, %v1286
      %v1288 = vpop.f32.mrf.mxu0
      %v1289 = vadd.f32 %v1231, %v1288
      %1290 = vmatmul.bf16.gmra.mxu0 %v1257
      %v1291 = vpop.f32.mrf.mxu0
      %v1292 = vadd.f32 %v1231, %v1291
      %v1293 = vpop.f32.mrf.mxu0
      %v1294 = vadd.f32 %v1231, %v1293
      %1295 = vmatmul.bf16.gmra.mxu0 %v1260
      %v1296 = vpop.f32.mrf.mxu0
      %v1297 = vadd.f32 %v1231, %v1296
      %v1298 = vpop.f32.mrf.mxu0
      %v1299 = vadd.f32 %v1231, %v1298
      %1300 = vdwg.mxu0
      %v1301 = vadd.f32 %v1272, %v678
      %v1302 = vadd.f32 %v1274, %v679
      %v1303 = vadd.f32 %v1277, %v680
      %v1304 = vadd.f32 %v1279, %v681
      %v1305 = vadd.f32 %v1282, %v682
      %v1306 = vadd.f32 %v1284, %v683
      %v1307 = vadd.f32 %v1287, %v684
      %v1308 = vadd.f32 %v1289, %v685
      %v1309 = vadd.f32 %v1292, %v686
      %v1310 = vadd.f32 %v1294, %v687
      %v1311 = vadd.f32 %v1297, %v688
      %v1312 = vadd.f32 %v1299, %v689
      %v1313 = vmul.f32 %v1301, 0.01
      %v1314 = vmul.f32 %v1302, 0.01
      %v1315 = vmul.f32 %v1303, 0.01
      %v1316 = vmul.f32 %v1304, 0.01
      %v1317 = vmul.f32 %v1305, 0.01
      %v1318 = vmul.f32 %v1306, 0.01
      %v1319 = vmul.f32 %v1307, 0.01
      %v1320 = vmul.f32 %v1308, 0.01
      %v1321 = vmul.f32 %v1309, 0.01
      %v1322 = vmul.f32 %v1310, 0.01
      %v1323 = vmul.f32 %v1311, 0.01
      %v1324 = vmul.f32 %v1312, 0.01
      %v1325 = vmax.f32 %v1301, %v1313
      %v1326 = vmax.f32 %v1302, %v1314
      %v1327 = vmax.f32 %v1303, %v1315
      %v1328 = vmax.f32 %v1304, %v1316
      %v1329 = vmax.f32 %v1305, %v1317
      %v1330 = vmax.f32 %v1306, %v1318
      %v1331 = vmax.f32 %v1307, %v1319
      %v1332 = vmax.f32 %v1308, %v1320
      %v1333 = vmax.f32 %v1309, %v1321
      %v1334 = vmax.f32 %v1310, %v1322
      %v1335 = vmax.f32 %v1311, %v1323
      %v1336 = vmax.f32 %v1312, %v1324
      %v1337 = vadd.f32 %v943, %v766
      %v1338 = vadd.f32 %v944, %v767
      %v1339 = vadd.f32 %v1325, %v678
      %v1340 = vadd.f32 %v1326, %v679
      %v1341 = vadd.f32 %v1327, %v680
      %v1342 = vadd.f32 %v1328, %v681
      %v1343 = vadd.f32 %v1329, %v682
      %v1344 = vadd.f32 %v1330, %v683
      %v1345 = vadd.f32 %v1331, %v684
      %v1346 = vadd.f32 %v1332, %v685
      %v1347 = vadd.f32 %v1333, %v686
      %v1348 = vadd.f32 %v1334, %v687
      %v1349 = vadd.f32 %v1335, %v688
      %v1350 = vadd.f32 %v1336, %v689
      %v1351 = vpack.c.bf16 %v1340, %v1339
      %v1352 = vpack.c.bf16 %v1342, %v1341
      %v1353 = vpack.c.bf16 %v1344, %v1343
      %v1354 = vpack.c.bf16 %v1346, %v1345
      %v1355 = vpack.c.bf16 %v1348, %v1347
      %v1356 = vpack.c.bf16 %v1350, %v1349
      %v1357 = vpack.c.bf16 %v1338, %v1337
      %1358 = vmatpush.bf16.msra.mxu0 0
      %1359 = vmatpush.bf16.msra.mxu0 0
      %1360 = vmatpush.bf16.msra.mxu0 %v1356
      %1361 = vmatpush.bf16.msra.mxu0 %v1355
      %1362 = vmatpush.bf16.msra.mxu0 %v1354
      %1363 = vmatpush.bf16.msra.mxu0 %v1353
      %1364 = vmatpush.bf16.msra.mxu0 %v1352
      %1365 = vmatpush.bf16.msra.mxu0 %v1351
      %1366 = vmatmul.bf16.gmra.mxu0 %v782
      %v1367 = vpop.f32.mrf.mxu0
      %v1368 = vadd.f32 0.0, %v1367
      %v1369 = vpop.f32.mrf.mxu0
      %v1370 = vadd.f32 0.0, %v1369
      %1371 = vdwg.mxu0
      %v1372 = vmul.f32 %v1368, 0.125
      %v1373 = vmul.f32 %v1370, 0.125
      %v1374 = vpack.c.bf16 %v1373, %v1372
      %s1375 = scalar_lea.vmem %s7, 16
      %v1376 = vld [vmem:[%s1375] sm:$0xf]
      %v1377 = vld [vmem:[%s1375 + $0x4] sm:$0xf]
      %v1378 = vld [vmem:[%s1375 + $0x8] sm:$0xf]
      %v1379 = vld [vmem:[%s1375 + $0xc] sm:$0xf]
      %v1380 = vpack.c.bf16 %v1370, %v1368
      %s1381 = scalar_lea.vmem %s8, 16
      %v1382 = vld [vmem:[%s1381] sm:$0xf]
      %v1383 = vld [vmem:[%s1381 + $0x4] sm:$0xf]
      %v1384 = vld [vmem:[%s1381 + $0x8] sm:$0xf]
      %v1385 = vld [vmem:[%s1381 + $0xc] sm:$0xf]
      %v1390 = vunpack.c.l.b16 %v1382
      %v1391 = vunpack.c.l.b16 %v1383
      %v1392 = vunpack.c.l.b16 %v1384
      %v1393 = vunpack.c.l.b16 %v1385
      %v1394 = vpack.c.b16 %v1391, %v1390
      %v1395 = vpack.c.b16 %v1393, %v1392
      %v1399 = vsel %vm746, %v1380, 0
      %1401 = vmatpush.bf16.msra.mxu0 0
      %1402 = vmatpush.bf16.msra.mxu0 0
      %1403 = vmatpush.bf16.msra.mxu0 0
      %1404 = vmatpush.bf16.msra.mxu0 0
      %1405 = vmatpush.bf16.msra.mxu0 0
      %1406 = vmatpush.bf16.msra.mxu0 0
      %1407 = vmatpush.bf16.msra.mxu0 %v1395
      %1408 = vmatpush.bf16.msra.mxu0 %v1394
      %1409 = vmatmul.bf16.gmra.mxu0 %v1399
      %v1410 = vpop.f32.mrf.mxu0
      %v1411 = vadd.f32 0.0, %v1410
      %v1412 = vpop.f32.mrf.mxu0
      %v1413 = vadd.f32 0.0, %v1412
      %1414 = vdwg.mxu0
      %v1419 = vunpack.c.l.b16 %v1376
      %v1420 = vunpack.c.l.b16 %v1377
      %v1421 = vunpack.c.l.b16 %v1378
      %v1422 = vunpack.c.l.b16 %v1379
      %v1423 = vpack.c.b16 %v1420, %v1419
      %v1424 = vpack.c.b16 %v1422, %v1421
      %v1428 = vsel %vm746, %v1374, 0
      %1430 = vmatpush.bf16.msra.mxu0 0
      %1431 = vmatpush.bf16.msra.mxu0 0
      %1432 = vmatpush.bf16.msra.mxu0 0
      %1433 = vmatpush.bf16.msra.mxu0 0
      %1434 = vmatpush.bf16.msra.mxu0 0
      %1435 = vmatpush.bf16.msra.mxu0 0
      %1436 = vmatpush.bf16.msra.mxu0 %v1424
      %1437 = vmatpush.bf16.msra.mxu0 %v1423
      %1438 = vmatmul.bf16.gmra.mxu0 %v1428
      %v1439 = vpop.f32.mrf.mxu0
      %v1440 = vadd.f32 %v1411, %v1439
      %v1441 = vpop.f32.mrf.mxu0
      %v1442 = vadd.f32 %v1413, %v1441
      %1443 = vdwg.mxu0
      %s1444 = scalar_lea.vmem %s9, 8
      %v1445 = vld [vmem:[%s1444] sm:$0xf]
      %v1446 = vld [vmem:[%s1444 + $0x4] sm:$0xf]
      %v1449 = vunpack.c.l.b16 %v1445
      %v1450 = vunpack.c.l.b16 %v1446
      %v1451 = vpack.c.b16 %v1450, %v1449
      %v1454 = vsel %vm705, %v1357, 0
      %1456 = vmatpush.bf16.msra.mxu0 0
      %1457 = vmatpush.bf16.msra.mxu0 0
      %1458 = vmatpush.bf16.msra.mxu0 0
      %1459 = vmatpush.bf16.msra.mxu0 0
      %1460 = vmatpush.bf16.msra.mxu0 0
      %1461 = vmatpush.bf16.msra.mxu0 0
      %1462 = vmatpush.bf16.msra.mxu0 0
      %1463 = vmatpush.bf16.msra.mxu0 %v1451
      %1464 = vmatmul.bf16.gmra.mxu0 %v1454
      %v1465 = vpop.f32.mrf.mxu0
      %v1466 = vadd.f32 0.0, %v1465
      %v1467 = vpop.f32.mrf.mxu0
      %v1468 = vadd.f32 0.0, %v1467
      %1469 = vdwg.mxu0
      %v1470 = vadd.f32 %v1440, %v1466
      %v1471 = vadd.f32 %v1442, %v1468
      %v1472 = vld [vmem:[%s15 + $0x8] sm:$0x1]
      %v1473 = vperm.slane %v1472, 0
      %v1474 = vadd.f32 %v1470, %v1473
      %v1475 = vadd.f32 %v1471, %v1473
      %v1476 = vmul.f32 %v1474, 0.01
      %v1477 = vmul.f32 %v1475, 0.01
      %v1478 = vmax.f32 %v1474, %v1476
      %v1479 = vmax.f32 %v1475, %v1477
      %v1480 = vpack.c.bf16 %v1479, %v1478
      %s1481 = scalar_lea.vmem %s10, 16
      %v1482 = vld [vmem:[%s1481] sm:$0xf]
      %v1483 = vld [vmem:[%s1481 + $0x4] sm:$0xf]
      %v1484 = vld [vmem:[%s1481 + $0x8] sm:$0xf]
      %v1485 = vld [vmem:[%s1481 + $0xc] sm:$0xf]
      %v1486 = vld [vmem:[%s15 + $0x9] sm:$0x1]
      %v1487 = vperm.slane %v1486, 0
      %v1492 = vunpack.c.l.b16 %v1482
      %v1493 = vunpack.c.l.b16 %v1483
      %v1494 = vunpack.c.l.b16 %v1484
      %v1495 = vunpack.c.l.b16 %v1485
      %v1496 = vpack.c.b16 %v1493, %v1492
      %v1497 = vpack.c.b16 %v1495, %v1494
      %v1501 = vsel %vm746, %v1480, 0
      %1503 = vmatpush.bf16.msra.mxu0 0
      %1504 = vmatpush.bf16.msra.mxu0 0
      %1505 = vmatpush.bf16.msra.mxu0 0
      %1506 = vmatpush.bf16.msra.mxu0 0
      %1507 = vmatpush.bf16.msra.mxu0 0
      %1508 = vmatpush.bf16.msra.mxu0 0
      %1509 = vmatpush.bf16.msra.mxu0 %v1497
      %1510 = vmatpush.bf16.msra.mxu0 %v1496
      %1511 = vmatmul.bf16.gmra.mxu0 %v1501
      %v1512 = vpop.f32.mrf.mxu0
      %v1513 = vadd.f32 %v1487, %v1512
      %v1514 = vpop.f32.mrf.mxu0
      %v1515 = vadd.f32 %v1487, %v1514
      %1516 = vdwg.mxu0
      %v1517 = vadd.f32 %v1513, %v1337
      %v1518 = vadd.f32 %v1515, %v1338
      %v1519 = vmul.f32 %v1517, 0.01
      %v1520 = vmul.f32 %v1518, 0.01
      %v1521 = vmax.f32 %v1517, %v1519
      %v1522 = vmax.f32 %v1518, %v1520
      %v1523 = vpack.c.bf16 %v1522, %v1521
      %v1525 = vsel %vm995, %v1523, 0
      %1527 = vmatpush.bf16.msra.mxu0 0
      %1528 = vmatpush.bf16.msra.mxu0 0
      %1529 = vmatpush.bf16.msra.mxu0 0
      %1530 = vmatpush.bf16.msra.mxu0 0
      %1531 = vmatpush.bf16.msra.mxu0 0
      %1532 = vmatpush.bf16.msra.mxu0 0
      %1533 = vmatpush.bf16.msra.mxu0 0
      %1534 = vmatpush.bf16.msra.mxu0 %v1525
      %1535 = vmatmul.bf16.gmra.mxu0 %v978
      %v1536 = vpop.f32.mrf.mxu0
      %v1537 = vadd.f32 0.0, %v1536
      %v1538 = vpop.f32.mrf.mxu0
      %v1539 = vadd.f32 0.0, %v1538
      %1540 = vmatmul.bf16.gmra.mxu0 %v981
      %v1541 = vpop.f32.mrf.mxu0
      %v1542 = vadd.f32 0.0, %v1541
      %v1543 = vpop.f32.mrf.mxu0
      %v1544 = vadd.f32 0.0, %v1543
      %1545 = vmatmul.bf16.gmra.mxu0 %v984
      %v1546 = vpop.f32.mrf.mxu0
      %v1547 = vadd.f32 0.0, %v1546
      %v1548 = vpop.f32.mrf.mxu0
      %v1549 = vadd.f32 0.0, %v1548
      %1550 = vmatmul.bf16.gmra.mxu0 %v987
      %v1551 = vpop.f32.mrf.mxu0
      %v1552 = vadd.f32 0.0, %v1551
      %v1553 = vpop.f32.mrf.mxu0
      %v1554 = vadd.f32 0.0, %v1553
      %1555 = vmatmul.bf16.gmra.mxu0 %v990
      %v1556 = vpop.f32.mrf.mxu0
      %v1557 = vadd.f32 0.0, %v1556
      %v1558 = vpop.f32.mrf.mxu0
      %v1559 = vadd.f32 0.0, %v1558
      %1560 = vmatmul.bf16.gmra.mxu0 %v993
      %v1561 = vpop.f32.mrf.mxu0
      %v1562 = vadd.f32 0.0, %v1561
      %v1563 = vpop.f32.mrf.mxu0
      %v1564 = vadd.f32 0.0, %v1563
      %1565 = vdwg.mxu0
      %s1566 = scalar_lea.vmem %s11, 16
      %v1567 = vld [vmem:[%s1566] sm:$0xf]
      %v1568 = vld [vmem:[%s1566 + $0x4] sm:$0xf]
      %v1569 = vld [vmem:[%s1566 + $0x8] sm:$0xf]
      %v1570 = vld [vmem:[%s1566 + $0xc] sm:$0xf]
      %v1571 = vpack.c.bf16 %v1539, %v1537
      %v1572 = vpack.c.bf16 %v1544, %v1542
      %v1573 = vpack.c.bf16 %v1549, %v1547
      %v1574 = vpack.c.bf16 %v1554, %v1552
      %v1575 = vpack.c.bf16 %v1559, %v1557
      %v1576 = vpack.c.bf16 %v1564, %v1562
      %s1577 = scalar_lea.vmem %s12, 8
      %v1578 = vld [vmem:[%s1577] sm:$0xf]
      %v1579 = vld [vmem:[%s1577 + $0x4] sm:$0xf]
      %v1582 = vunpack.c.l.b16 %v1578
      %v1583 = vunpack.c.l.b16 %v1579
      %v1584 = vpack.c.b16 %v1583, %v1582
      %v1587 = vsel %vm705, %v1571, 0
      %v1590 = vsel %vm705, %v1572, 0
      %v1593 = vsel %vm705, %v1573, 0
      %v1596 = vsel %vm705, %v1574, 0
      %v1599 = vsel %vm705, %v1575, 0
      %v1602 = vsel %vm705, %v1576, 0
      %1604 = vmatpush.bf16.msra.mxu0 0
      %1605 = vmatpush.bf16.msra.mxu0 0
      %1606 = vmatpush.bf16.msra.mxu0 0
      %1607 = vmatpush.bf16.msra.mxu0 0
      %1608 = vmatpush.bf16.msra.mxu0 0
      %1609 = vmatpush.bf16.msra.mxu0 0
      %1610 = vmatpush.bf16.msra.mxu0 0
      %1611 = vmatpush.bf16.msra.mxu0 %v1584
      %1612 = vmatmul.bf16.gmra.mxu0 %v1587
      %v1613 = vpop.f32.mrf.mxu0
      %v1614 = vadd.f32 0.0, %v1613
      %v1615 = vpop.f32.mrf.mxu0
      %v1616 = vadd.f32 0.0, %v1615
      %1617 = vmatmul.bf16.gmra.mxu0 %v1590
      %v1618 = vpop.f32.mrf.mxu0
      %v1619 = vadd.f32 0.0, %v1618
      %v1620 = vpop.f32.mrf.mxu0
      %v1621 = vadd.f32 0.0, %v1620
      %1622 = vmatmul.bf16.gmra.mxu0 %v1593
      %v1623 = vpop.f32.mrf.mxu0
      %v1624 = vadd.f32 0.0, %v1623
      %v1625 = vpop.f32.mrf.mxu0
      %v1626 = vadd.f32 0.0, %v1625
      %1627 = vmatmul.bf16.gmra.mxu0 %v1596
      %v1628 = vpop.f32.mrf.mxu0
      %v1629 = vadd.f32 0.0, %v1628
      %v1630 = vpop.f32.mrf.mxu0
      %v1631 = vadd.f32 0.0, %v1630
      %1632 = vmatmul.bf16.gmra.mxu0 %v1599
      %v1633 = vpop.f32.mrf.mxu0
      %v1634 = vadd.f32 0.0, %v1633
      %v1635 = vpop.f32.mrf.mxu0
      %v1636 = vadd.f32 0.0, %v1635
      %1637 = vmatmul.bf16.gmra.mxu0 %v1602
      %v1638 = vpop.f32.mrf.mxu0
      %v1639 = vadd.f32 0.0, %v1638
      %v1640 = vpop.f32.mrf.mxu0
      %v1641 = vadd.f32 0.0, %v1640
      %1642 = vdwg.mxu0
      %v1647 = vunpack.c.l.b16 %v1567
      %v1648 = vunpack.c.l.b16 %v1568
      %v1649 = vunpack.c.l.b16 %v1569
      %v1650 = vunpack.c.l.b16 %v1570
      %v1651 = vpack.c.b16 %v1648, %v1647
      %v1652 = vpack.c.b16 %v1650, %v1649
      %v1656 = vsel %vm746, %v1351, 0
      %v1659 = vsel %vm746, %v1352, 0
      %v1662 = vsel %vm746, %v1353, 0
      %v1665 = vsel %vm746, %v1354, 0
      %v1668 = vsel %vm746, %v1355, 0
      %v1671 = vsel %vm746, %v1356, 0
      %1673 = vmatpush.bf16.msra.mxu0 0
      %1674 = vmatpush.bf16.msra.mxu0 0
      %1675 = vmatpush.bf16.msra.mxu0 0
      %1676 = vmatpush.bf16.msra.mxu0 0
      %1677 = vmatpush.bf16.msra.mxu0 0
      %1678 = vmatpush.bf16.msra.mxu0 0
      %1679 = vmatpush.bf16.msra.mxu0 %v1652
      %1680 = vmatpush.bf16.msra.mxu0 %v1651
      %1681 = vmatmul.bf16.gmra.mxu0 %v1656
      %v1682 = vpop.f32.mrf.mxu0
      %v1683 = vadd.f32 %v1614, %v1682
      %v1684 = vpop.f32.mrf.mxu0
      %v1685 = vadd.f32 %v1616, %v1684
      %1686 = vmatmul.bf16.gmra.mxu0 %v1659
      %v1687 = vpop.f32.mrf.mxu0
      %v1688 = vadd.f32 %v1619, %v1687
      %v1689 = vpop.f32.mrf.mxu0
      %v1690 = vadd.f32 %v1621, %v1689
      %1691 = vmatmul.bf16.gmra.mxu0 %v1662
      %v1692 = vpop.f32.mrf.mxu0
      %v1693 = vadd.f32 %v1624, %v1692
      %v1694 = vpop.f32.mrf.mxu0
      %v1695 = vadd.f32 %v1626, %v1694
      %1696 = vmatmul.bf16.gmra.mxu0 %v1665
      %v1697 = vpop.f32.mrf.mxu0
      %v1698 = vadd.f32 %v1629, %v1697
      %v1699 = vpop.f32.mrf.mxu0
      %v1700 = vadd.f32 %v1631, %v1699
      %1701 = vmatmul.bf16.gmra.mxu0 %v1668
      %v1702 = vpop.f32.mrf.mxu0
      %v1703 = vadd.f32 %v1634, %v1702
      %v1704 = vpop.f32.mrf.mxu0
      %v1705 = vadd.f32 %v1636, %v1704
      %1706 = vmatmul.bf16.gmra.mxu0 %v1671
      %v1707 = vpop.f32.mrf.mxu0
      %v1708 = vadd.f32 %v1639, %v1707
      %v1709 = vpop.f32.mrf.mxu0
      %v1710 = vadd.f32 %v1641, %v1709
      %1711 = vdwg.mxu0
      %v1712 = vld [vmem:[%s15 + $0xa] sm:$0x1]
      %v1713 = vperm.slane %v1712, 0
      %v1714 = vadd.f32 %v1683, %v1713
      %v1715 = vadd.f32 %v1685, %v1713
      %v1716 = vadd.f32 %v1688, %v1713
      %v1717 = vadd.f32 %v1690, %v1713
      %v1718 = vadd.f32 %v1693, %v1713
      %v1719 = vadd.f32 %v1695, %v1713
      %v1720 = vadd.f32 %v1698, %v1713
      %v1721 = vadd.f32 %v1700, %v1713
      %v1722 = vadd.f32 %v1703, %v1713
      %v1723 = vadd.f32 %v1705, %v1713
      %v1724 = vadd.f32 %v1708, %v1713
      %v1725 = vadd.f32 %v1710, %v1713
      %v1726 = vmul.f32 %v1714, 0.01
      %v1727 = vmul.f32 %v1715, 0.01
      %v1728 = vmul.f32 %v1716, 0.01
      %v1729 = vmul.f32 %v1717, 0.01
      %v1730 = vmul.f32 %v1718, 0.01
      %v1731 = vmul.f32 %v1719, 0.01
      %v1732 = vmul.f32 %v1720, 0.01
      %v1733 = vmul.f32 %v1721, 0.01
      %v1734 = vmul.f32 %v1722, 0.01
      %v1735 = vmul.f32 %v1723, 0.01
      %v1736 = vmul.f32 %v1724, 0.01
      %v1737 = vmul.f32 %v1725, 0.01
      %v1738 = vmax.f32 %v1714, %v1726
      %v1739 = vmax.f32 %v1715, %v1727
      %v1740 = vmax.f32 %v1716, %v1728
      %v1741 = vmax.f32 %v1717, %v1729
      %v1742 = vmax.f32 %v1718, %v1730
      %v1743 = vmax.f32 %v1719, %v1731
      %v1744 = vmax.f32 %v1720, %v1732
      %v1745 = vmax.f32 %v1721, %v1733
      %v1746 = vmax.f32 %v1722, %v1734
      %v1747 = vmax.f32 %v1723, %v1735
      %v1748 = vmax.f32 %v1724, %v1736
      %v1749 = vmax.f32 %v1725, %v1737
      %v1750 = vpack.c.bf16 %v1739, %v1738
      %v1751 = vpack.c.bf16 %v1741, %v1740
      %v1752 = vpack.c.bf16 %v1743, %v1742
      %v1753 = vpack.c.bf16 %v1745, %v1744
      %v1754 = vpack.c.bf16 %v1747, %v1746
      %v1755 = vpack.c.bf16 %v1749, %v1748
      %s1756 = scalar_lea.vmem %s13, 16
      %v1757 = vld [vmem:[%s1756] sm:$0xf]
      %v1758 = vld [vmem:[%s1756 + $0x4] sm:$0xf]
      %v1759 = vld [vmem:[%s1756 + $0x8] sm:$0xf]
      %v1760 = vld [vmem:[%s1756 + $0xc] sm:$0xf]
      %v1761 = vld [vmem:[%s15 + $0xb] sm:$0x1]
      %v1762 = vperm.slane %v1761, 0
      %v1767 = vunpack.c.l.b16 %v1757
      %v1768 = vunpack.c.l.b16 %v1758
      %v1769 = vunpack.c.l.b16 %v1759
      %v1770 = vunpack.c.l.b16 %v1760
      %v1771 = vpack.c.b16 %v1768, %v1767
      %v1772 = vpack.c.b16 %v1770, %v1769
      %v1776 = vsel %vm746, %v1750, 0
      %v1779 = vsel %vm746, %v1751, 0
      %v1782 = vsel %vm746, %v1752, 0
      %v1785 = vsel %vm746, %v1753, 0
      %v1788 = vsel %vm746, %v1754, 0
      %v1791 = vsel %vm746, %v1755, 0
      %1793 = vmatpush.bf16.msra.mxu0 0
      %1794 = vmatpush.bf16.msra.mxu0 0
      %1795 = vmatpush.bf16.msra.mxu0 0
      %1796 = vmatpush.bf16.msra.mxu0 0
      %1797 = vmatpush.bf16.msra.mxu0 0
      %1798 = vmatpush.bf16.msra.mxu0 0
      %1799 = vmatpush.bf16.msra.mxu0 %v1772
      %1800 = vmatpush.bf16.msra.mxu0 %v1771
      %1801 = vmatmul.bf16.gmra.mxu0 %v1776
      %v1802 = vpop.f32.mrf.mxu0
      %v1803 = vadd.f32 %v1762, %v1802
      %v1804 = vpop.f32.mrf.mxu0
      %v1805 = vadd.f32 %v1762, %v1804
      %1806 = vmatmul.bf16.gmra.mxu0 %v1779
      %v1807 = vpop.f32.mrf.mxu0
      %v1808 = vadd.f32 %v1762, %v1807
      %v1809 = vpop.f32.mrf.mxu0
      %v1810 = vadd.f32 %v1762, %v1809
      %1811 = vmatmul.bf16.gmra.mxu0 %v1782
      %v1812 = vpop.f32.mrf.mxu0
      %v1813 = vadd.f32 %v1762, %v1812
      %v1814 = vpop.f32.mrf.mxu0
      %v1815 = vadd.f32 %v1762, %v1814
      %1816 = vmatmul.bf16.gmra.mxu0 %v1785
      %v1817 = vpop.f32.mrf.mxu0
      %v1818 = vadd.f32 %v1762, %v1817
      %v1819 = vpop.f32.mrf.mxu0
      %v1820 = vadd.f32 %v1762, %v1819
      %1821 = vmatmul.bf16.gmra.mxu0 %v1788
      %v1822 = vpop.f32.mrf.mxu0
      %v1823 = vadd.f32 %v1762, %v1822
      %v1824 = vpop.f32.mrf.mxu0
      %v1825 = vadd.f32 %v1762, %v1824
      %1826 = vmatmul.bf16.gmra.mxu0 %v1791
      %v1827 = vpop.f32.mrf.mxu0
      %v1828 = vadd.f32 %v1762, %v1827
      %v1829 = vpop.f32.mrf.mxu0
      %v1830 = vadd.f32 %v1762, %v1829
      %1831 = vdwg.mxu0
      %v1832 = vadd.f32 %v1803, %v1339
      %v1833 = vadd.f32 %v1805, %v1340
      %v1834 = vadd.f32 %v1808, %v1341
      %v1835 = vadd.f32 %v1810, %v1342
      %v1836 = vadd.f32 %v1813, %v1343
      %v1837 = vadd.f32 %v1815, %v1344
      %v1838 = vadd.f32 %v1818, %v1345
      %v1839 = vadd.f32 %v1820, %v1346
      %v1840 = vadd.f32 %v1823, %v1347
      %v1841 = vadd.f32 %v1825, %v1348
      %v1842 = vadd.f32 %v1828, %v1349
      %v1843 = vadd.f32 %v1830, %v1350
      %v1844 = vmul.f32 %v1832, 0.01
      %v1845 = vmul.f32 %v1833, 0.01
      %v1846 = vmul.f32 %v1834, 0.01
      %v1847 = vmul.f32 %v1835, 0.01
      %v1848 = vmul.f32 %v1836, 0.01
      %v1849 = vmul.f32 %v1837, 0.01
      %v1850 = vmul.f32 %v1838, 0.01
      %v1851 = vmul.f32 %v1839, 0.01
      %v1852 = vmul.f32 %v1840, 0.01
      %v1853 = vmul.f32 %v1841, 0.01
      %v1854 = vmul.f32 %v1842, 0.01
      %v1855 = vmul.f32 %v1843, 0.01
      %v1856 = vmax.f32 %v1832, %v1844
      %v1857 = vmax.f32 %v1833, %v1845
      %v1858 = vmax.f32 %v1834, %v1846
      %v1859 = vmax.f32 %v1835, %v1847
      %v1860 = vmax.f32 %v1836, %v1848
      %v1861 = vmax.f32 %v1837, %v1849
      %v1862 = vmax.f32 %v1838, %v1850
      %v1863 = vmax.f32 %v1839, %v1851
      %v1864 = vmax.f32 %v1840, %v1852
      %v1865 = vmax.f32 %v1841, %v1853
      %v1866 = vmax.f32 %v1842, %v1854
      %v1867 = vmax.f32 %v1843, %v1855
      %v1868 = vadd.f32 %v1856, %v678
      %v1869 = vadd.f32 %v1857, %v679
      %v1870 = vadd.f32 %v1858, %v680
      %v1871 = vadd.f32 %v1859, %v681
      %v1872 = vadd.f32 %v1860, %v682
      %v1873 = vadd.f32 %v1861, %v683
      %v1874 = vadd.f32 %v1862, %v684
      %v1875 = vadd.f32 %v1863, %v685
      %v1876 = vadd.f32 %v1864, %v686
      %v1877 = vadd.f32 %v1865, %v687
      %v1878 = vadd.f32 %v1866, %v688
      %v1879 = vadd.f32 %v1867, %v689
      %v1880 = vpack.c.bf16 %v1869, %v1868
      %v1881 = vpack.c.bf16 %v1871, %v1870
      %v1882 = vpack.c.bf16 %v1873, %v1872
      %v1883 = vpack.c.bf16 %v1875, %v1874
      %v1884 = vpack.c.bf16 %v1877, %v1876
      %v1885 = vpack.c.bf16 %v1879, %v1878
      %v1886 = vld [vmem:[%s14] sm:$0xf]
      %v1887 = vld [vmem:[%s14 + $0x4] sm:$0xf]
      %v1888 = vld [vmem:[%s14 + $0x8] sm:$0xf]
      %v1889 = vld [vmem:[%s14 + $0xc] sm:$0xf]
      %v1890 = vld [vmem:[%s15 + $0x3] sm:$0x1]
      %v1891 = vperm.slane %v1890, 0
      %v1896 = vunpack.c.l.b16 %v1886
      %v1897 = vunpack.c.l.b16 %v1887
      %v1898 = vunpack.c.l.b16 %v1888
      %v1899 = vunpack.c.l.b16 %v1889
      %v1900 = vpack.c.b16 %v1897, %v1896
      %v1901 = vpack.c.b16 %v1899, %v1898
      %v1905 = vsel %vm746, %v1880, 0
      %v1908 = vsel %vm746, %v1881, 0
      %v1911 = vsel %vm746, %v1882, 0
      %v1914 = vsel %vm746, %v1883, 0
      %v1917 = vsel %vm746, %v1884, 0
      %v1920 = vsel %vm746, %v1885, 0
      %1922 = vmatpush.bf16.msra.mxu0 0
      %1923 = vmatpush.bf16.msra.mxu0 0
      %1924 = vmatpush.bf16.msra.mxu0 0
      %1925 = vmatpush.bf16.msra.mxu0 0
      %1926 = vmatpush.bf16.msra.mxu0 0
      %1927 = vmatpush.bf16.msra.mxu0 0
      %1928 = vmatpush.bf16.msra.mxu0 %v1901
      %1929 = vmatpush.bf16.msra.mxu0 %v1900
      %1930 = vmatmul.bf16.gmra.mxu0 %v1905
      %v1931 = vpop.f32.mrf.mxu0
      %v1932 = vadd.f32 %v1891, %v1931
      %v1933 = vpop.f32.mrf.mxu0
      %v1934 = vadd.f32 %v1891, %v1933
      %1935 = vmatmul.bf16.gmra.mxu0 %v1908
      %v1936 = vpop.f32.mrf.mxu0
      %v1937 = vadd.f32 %v1891, %v1936
      %v1938 = vpop.f32.mrf.mxu0
      %v1939 = vadd.f32 %v1891, %v1938
      %1940 = vmatmul.bf16.gmra.mxu0 %v1911
      %v1941 = vpop.f32.mrf.mxu0
      %v1942 = vadd.f32 %v1891, %v1941
      %v1943 = vpop.f32.mrf.mxu0
      %v1944 = vadd.f32 %v1891, %v1943
      %1945 = vmatmul.bf16.gmra.mxu0 %v1914
      %v1946 = vpop.f32.mrf.mxu0
      %v1947 = vadd.f32 %v1891, %v1946
      %v1948 = vpop.f32.mrf.mxu0
      %v1949 = vadd.f32 %v1891, %v1948
      %1950 = vmatmul.bf16.gmra.mxu0 %v1917
      %v1951 = vpop.f32.mrf.mxu0
      %v1952 = vadd.f32 %v1891, %v1951
      %v1953 = vpop.f32.mrf.mxu0
      %v1954 = vadd.f32 %v1891, %v1953
      %1955 = vmatmul.bf16.gmra.mxu0 %v1920
      %v1956 = vpop.f32.mrf.mxu0
      %v1957 = vadd.f32 %v1891, %v1956
      %v1958 = vpop.f32.mrf.mxu0
      %v1959 = vadd.f32 %v1891, %v1958
      %1960 = vdwg.mxu0
      %vm1961 = vcmask 31744
      %1962 = vst.msk [vmem:[%s541] sm:$0xff] %vm1961, %v1932
      %1963 = vst.msk [vmem:[%s541 + $0x8] sm:$0xff] %vm1961, %v1934
      %1964 = vst.msk [vmem:[%s541 + $0x10] sm:$0xff] %vm1961, %v1937
      %1965 = vst.msk [vmem:[%s541 + $0x18] sm:$0xff] %vm1961, %v1939
      %1966 = vst.msk [vmem:[%s541 + $0x20] sm:$0xff] %vm1961, %v1942
      %1967 = vst.msk [vmem:[%s541 + $0x28] sm:$0xff] %vm1961, %v1944
      %1968 = vst.msk [vmem:[%s541 + $0x30] sm:$0xff] %vm1961, %v1947
      %1969 = vst.msk [vmem:[%s541 + $0x38] sm:$0xff] %vm1961, %v1949
      %1970 = vst.msk [vmem:[%s541 + $0x40] sm:$0xff] %vm1961, %v1952
      %1971 = vst.msk [vmem:[%s541 + $0x48] sm:$0xff] %vm1961, %v1954
      %1972 = vst.msk [vmem:[%s541 + $0x50] sm:$0xff] %vm1961, %v1957
      %1973 = vst.msk [vmem:[%s541 + $0x58] sm:$0xff] %vm1961, %v1959
      %p1974 = scmp.lt.s32.totalorder %s27, 1
      %s1975 = scalar_select %p1974, %s27, 1
      %s1976 = smul.addr %s1975, 12
      %s1977 = smul.addr %s1976, 8
      %s1978 = scalar_lea.vmem %s16, %s1977
      // Predicated region
      $region85: #{tpu_custom_call.1} parent=83 // pred_check
        %p1979 = pneg %p391
      $region86: #{tpu_custom_call.1} parent=83 // pred_check_branch
        %1981 = sbr.rel (%p1979) target = $region88
      $region87: #{tpu_custom_call.1} parent=83 // pred_region
        _
      $region88: #{tpu_custom_call.1} parent=83 // pred_fallthru
        _
    $region84: #{tpu_custom_call.1} parent=5 // pred_fallthru
      _
    %p1982 = scmp.le.s32.totalorder 2, %s22
    // Predicated region
    $region89: #{tpu_custom_call.1} parent=5 // pred_check
      %p1983 = pneg %p1982
    $region90: #{tpu_custom_call.1} parent=5 // pred_check_branch
      %1985 = sbr.rel (%p1983) target = $region92
    $region91: #{tpu_custom_call.1} parent=5 // pred_region
      %s1986 = ssub.s32 %s22, 2
      // Predicated region
      $region93: #{tpu_custom_call.1} parent=91 // pred_check
        %p1987 = pneg %p397
      $region94: #{tpu_custom_call.1} parent=91 // pred_check_branch
        %1989 = sbr.rel (%p1987) target = $region96
      $region95: #{tpu_custom_call.1} parent=91 // pred_region
        %p1990 = scmp.lt.s32.totalorder %s28, 1
        %s1991 = scalar_select %p1990, %s28, 1
        %s1992 = smul.addr %s1991, 12
        %s1993 = smul.addr %s1992, 8
        %s1994 = scalar_lea.vmem %s16, %s1993
      $region96: #{tpu_custom_call.1} parent=91 // pred_fallthru
        _
    $region92: #{tpu_custom_call.1} parent=5 // pred_fallthru
      _
  $region6: #{tpu_custom_call.1} parent=0 // loop_footer
    %s26 = sadd.s32 1, %s22
  $region7: #{tpu_custom_call.1} parent=0 // loop_footer_branch
    %21 = sbr.rel target = $region3
  $region8: #{tpu_custom_call.1} parent=0 // loop_exit
    _

</llo_original>
